<compile_context>
chip_gen: v6e
topology: v6e:2x2x1
jax: 0.10.0
libtpu: 0.0.40
codegen_flags: <defaults>
</compile_context>

<pallas_src>
import functools
import math

import jax
import jax.numpy as jnp
from jax.experimental import pallas as pl
from jax.experimental.pallas import tpu as pltpu

LANE = 128        # TPU lane width
ROW_TILE = 256    # node-row tile of A_hat streamed per grid step (review: 128 -> 256)
K_TILE = 256      # contraction-dim tile over the node axis


def _round_up(x, m):
    return ((x + m - 1) // m) * m


def _pad2d(x, rows, cols, dtype):
    """Cast to dtype and zero-pad a 2-D array up to (rows, cols)."""
    r, c = x.shape
    x = x.astype(dtype)
    if r == rows and c == cols:
        return x
    return jnp.pad(x, ((0, rows - r), (0, cols - c)))


@functools.lru_cache(maxsize=1)
def _vmem_limit_bytes():
    """Generation-dependent VMEM limit: ~3/4 of physical, capped at 100 MiB.
    v7x (64 MiB/TC) -> 48 MiB; v6e/v5e (128 MiB) -> 96 MiB."""
    try:
        cap = int(pltpu.get_tpu_info().vmem_capacity_bytes)
    except Exception:
        cap = 64 * 1024 * 1024  # conservative default (v7x per-TC)
    return min((cap * 3) // 4, 100 * 1024 * 1024)


def _compiler_params(dim_sem):
    return pltpu.CompilerParams(
        dimension_semantics=dim_sem,
        vmem_limit_bytes=_vmem_limit_bytes(),
    )


def _pick_tile(n_pad, target):
    """Largest tile <= target that divides n_pad (n_pad is a multiple of 128)."""
    if n_pad <= target:
        return n_pad
    for cand in (target, 256, 128):
        if n_pad % cand == 0:
            return cand
    return n_pad


# --------------------------------------------------------------------------- kernels

def _matmul_kernel(h_ref, w_ref, o_ref):
    # HW = H @ W (row-tiled over H), fp32 accumulation on the MXU.
    o_ref[...] = jnp.dot(
        h_ref[...], w_ref[...], preferred_element_type=jnp.float32
    ).astype(o_ref.dtype)


def _gcn_premul_kernel(a_ref, hw_ref, b_ref, o_ref, acc_ref, *, apply_act):
    # act( sum_k A[i,k] @ (H@W)[k] + b )  -- K-tiled, fp32 accumulator scratch.
    k = pl.program_id(1)

    @pl.when(k == 0)
    def _():
        acc_ref[...] = jnp.zeros_like(acc_ref)

    acc_ref[...] += jnp.dot(a_ref[...], hw_ref[...],
                            preferred_element_type=jnp.float32)

    @pl.when(k == pl.num_programs(1) - 1)
    def _():
        out = acc_ref[...] + b_ref[...]
        if apply_act:
            out = jnp.maximum(out, 0.0)
        o_ref[...] = out.astype(o_ref.dtype)


def _gcn_postmul_kernel(a_ref, h_ref, w_ref, b_ref, o_ref, acc_ref, *, apply_act):
    # act( (sum_k A[i,k] @ H[k]) @ W + b )  -- used when F_in < F_out.
    k = pl.program_id(1)

    @pl.when(k == 0)
    def _():
        acc_ref[...] = jnp.zeros_like(acc_ref)

    acc_ref[...] += jnp.dot(a_ref[...], h_ref[...],
                            preferred_element_type=jnp.float32)

    @pl.when(k == pl.num_programs(1) - 1)
    def _():
        out = jnp.dot(acc_ref[...].astype(w_ref.dtype), w_ref[...],
                      preferred_element_type=jnp.float32) + b_ref[...]
        if apply_act:
            out = jnp.maximum(out, 0.0)
        o_ref[...] = out.astype(o_ref.dtype)


# --------------------------------------------------------------------------- wrappers

def _matmul(h, w):
    """Row-tiled H @ W (bf16 in, fp32 accumulation, bf16 out). O(N*f) side kernel,
    given its own (larger) row tile independent of the main kernel's tm."""
    n_pad, f_in_pad = h.shape
    f_out_pad = w.shape[1]
    tm = _pick_tile(n_pad, 512)
    return pl.pallas_call(
        _matmul_kernel,
        out_shape=jax.ShapeDtypeStruct((n_pad, f_out_pad), h.dtype),
        grid=(n_pad // tm,),
        in_specs=[
            pl.BlockSpec((tm, f_in_pad), lambda i: (i, 0)),
            pl.BlockSpec((f_in_pad, f_out_pad), lambda i: (0, 0)),
        ],
        out_specs=pl.BlockSpec((tm, f_out_pad), lambda i: (i, 0)),
        compiler_params=_compiler_params(("parallel",)),
        cost_estimate=pl.CostEstimate(
            flops=2 * n_pad * f_in_pad * f_out_pad,
            transcendentals=0,
            bytes_accessed=2 * (n_pad * f_in_pad + f_in_pad * f_out_pad
                                + n_pad * f_out_pad),
        ),
    )(h, w)


def gcn_layer(a_hat_p, h_p, w, b, *, apply_act, out_dtype, tm, tk):
    """One GraphConv layer on padded bf16 operands: act(A_hat @ H @ W + b).

    a_hat_p: [n_pad, n_pad] bf16 (zero-padded), h_p: [n_pad, f_in_pad] bf16,
    w: [f_in, f_out] fp32, b: [f_out] fp32.  Returns [n_pad, f_out_pad] in out_dtype.
    """
    n_pad, f_in_pad = h_p.shape
    f_in, f_out = w.shape
    f_out_pad = _round_up(f_out, LANE)

    w_p = _pad2d(w, f_in_pad, f_out_pad, jnp.bfloat16)
    b_p = jnp.pad(b.astype(jnp.float32), (0, f_out_pad - f_out)).reshape(1, f_out_pad)

    grid = (n_pad // tm, n_pad // tk)   # (row tiles: parallel, K tiles: arbitrary)
    common = dict(
        out_shape=jax.ShapeDtypeStruct((n_pad, f_out_pad), out_dtype),
        grid=grid,
        out_specs=pl.BlockSpec((tm, f_out_pad), lambda i, k: (i, 0)),
        compiler_params=_compiler_params(("parallel", "arbitrary")),
    )
    out_bytes = n_pad * f_out_pad * jnp.dtype(out_dtype).itemsize

    if f_out_pad <= f_in_pad:
        # A @ (H @ W): the N^2-sized matmul runs over the smaller feature width.
        hw = _matmul(h_p, w_p)                              # [n_pad, f_out_pad] bf16
        kernel = functools.partial(_gcn_premul_kernel, apply_act=apply_act)
        return pl.pallas_call(
            kernel,
            in_specs=[
                pl.BlockSpec((tm, tk), lambda i, k: (i, k)),          # streamed A tile
                pl.BlockSpec((tk, f_out_pad), lambda i, k: (k, 0)),   # H@W K-tile
                pl.BlockSpec((1, f_out_pad), lambda i, k: (0, 0)),    # bias
            ],
            scratch_shapes=[pltpu.VMEM((tm, f_out_pad), jnp.float32)],
            cost_estimate=pl.CostEstimate(
                flops=2 * n_pad * n_pad * f_out_pad,
                transcendentals=0,
                bytes_accessed=2 * (n_pad * n_pad + n_pad * f_out_pad) + out_bytes,
            ),
            **common,
        )(a_hat_p, hw, b_p)
    else:
        # (A @ H) @ W: F_in < F_out, keep the N^2 matmul at the smaller width.
        kernel = functools.partial(_gcn_postmul_kernel, apply_act=apply_act)
        return pl.pallas_call(
            kernel,
            in_specs=[
                pl.BlockSpec((tm, tk), lambda i, k: (i, k)),            # streamed A tile
                pl.BlockSpec((tk, f_in_pad), lambda i, k: (k, 0)),      # H K-tile
                pl.BlockSpec((f_in_pad, f_out_pad), lambda i, k: (0, 0)),  # W
                pl.BlockSpec((1, f_out_pad), lambda i, k: (0, 0)),      # bias
            ],
            scratch_shapes=[pltpu.VMEM((tm, f_in_pad), jnp.float32)],
            cost_estimate=pl.CostEstimate(
                flops=2 * n_pad * n_pad * f_in_pad
                + 2 * n_pad * f_in_pad * f_out_pad,
                transcendentals=0,
                bytes_accessed=2 * (n_pad * n_pad + n_pad * f_in_pad
                                    + f_in_pad * f_out_pad) + out_bytes,
            ),
            **common,
        )(a_hat_p, h_p, w_p, b_p)


def encoder_forward(a_hat, features, params):
    """Encoder.forward: stacked GCN layers; ReLU on all but the last layer.
    Dropout is identity at inference time."""
    n = a_hat.shape[0]
    f_in = features.shape[1]

    # Row / K tiles and padded node count.  Node axis is always padded to at least
    # a full 128-lane width (review: avoid masked lanes / underfilled contraction).
    if n <= ROW_TILE:
        n_pad = _round_up(n, LANE)
        tm = n_pad
        tk = n_pad
    else:
        n_pad = _round_up(n, ROW_TILE)
        tm = ROW_TILE
        tk = K_TILE

    # Cast the dominant O(N^2) operand and features to bf16 once; zero-pad node dim
    # to the row tile and feature dim to the 128-lane width.  Padded A columns are
    # zero, so padded H rows never contaminate valid output rows.
    a_hat_p = _pad2d(a_hat, n_pad, n_pad, jnp.bfloat16)
    h = _pad2d(features, n_pad, _round_up(f_in, LANE), jnp.bfloat16)

    n_layers = len(params)
    for i, (w, b) in enumerate(params):
        last = i == n_layers - 1
        h = gcn_layer(
            a_hat_p, h, w, b,
            apply_act=not last,
            out_dtype=jnp.float32 if last else jnp.bfloat16,  # intermediates stay bf16/padded
            tm=tm, tk=tk,
        )

    f_out = params[-1][0].shape[1]
    return h[:n, :f_out]


# --------------------------------------------------------------------------- glue

def normalized_adjacency(adj):
    """A_hat = D^-1/2 (A + I) D^-1/2  (plain-JAX glue, not the hot path)."""
    n = adj.shape[0]
    a = adj + jnp.eye(n, dtype=adj.dtype)
    deg = jnp.sum(a, axis=1)
    d_inv_sqrt = 1.0 / jnp.sqrt(deg)
    return a * d_inv_sqrt[:, None] * d_inv_sqrt[None, :]


def glorot(key, shape):
    limit = math.sqrt(6.0 / (shape[0] + shape[1]))
    return jax.random.uniform(key, shape, jnp.float32, -limit, limit)


if __name__ == "__main__":
    key = jax.random.PRNGKey(0)
    k_adj, k_x, k_w1, k_w2 = jax.random.split(key, 4)

    # Small synthetic graph; sizes chosen so both matmul associations, node-dim
    # padding (300 -> 512), and a multi-tile (2 x 2) row/K grid get exercised.
    n_nodes = 300
    in_feats = 64
    hidden_dims = [256, 32]   # layer 1 grows features ((A@H)@W), layer 2 shrinks (A@(H@W))

    rand = jax.random.uniform(k_adj, (n_nodes, n_nodes))
    adj = (rand + rand.T > 1.2).astype(jnp.float32)
    adj = adj * (1.0 - jnp.eye(n_nodes))           # self loops added in normalization
    a_hat = normalized_adjacency(adj)

    features = jax.random.normal(k_x, (n_nodes, in_feats), jnp.float32)

    params = [
        (glorot(k_w1, (in_feats, hidden_dims[0])), jnp.zeros((hidden_dims[0],), jnp.float32)),
        (glorot(k_w2, (hidden_dims[0], hidden_dims[1])), jnp.zeros((hidden_dims[1],), jnp.float32)),
    ]

    out = encoder_forward(a_hat, features, params)
    out = jax.block_until_ready(out)

    # Plain fp32 JAX reference (same math).
    h_ref = jnp.maximum(a_hat @ features @ params[0][0] + params[0][1], 0.0)
    h_ref = a_hat @ h_ref @ params[1][0] + params[1][1]

    assert out.shape == (n_nodes, hidden_dims[-1])
    rel_err = jnp.max(jnp.abs(out - h_ref)) / (jnp.max(jnp.abs(h_ref)) + 1e-6)
    assert rel_err < 5e-2, f"max relative error {rel_err}"  # bf16 inputs, fp32 accumulation

    print("KERNEL_OK")
</pallas_src>

<mosaic_0001>
module attributes {stable_mosaic.version = 11 : i64} {
  func.func @_gcn_postmul_kernel(%arg0: i32, %arg1: i32, %arg2: memref<256x256xbf16, #tpu.memory_space<vmem>>, %arg3: memref<256x128xbf16, #tpu.memory_space<vmem>>, %arg4: memref<128x256xbf16, #tpu.memory_space<vmem>>, %arg5: memref<1x256xf32, #tpu.memory_space<vmem>>, %arg6: memref<256x256xbf16, #tpu.memory_space<vmem>>, %arg7: memref<256x128xf32, #tpu.memory_space<vmem>>) attributes {dimension_semantics = [#tpu.dimension_semantics<parallel>, #tpu.dimension_semantics<arbitrary>], iteration_bounds = array<i64: 2, 2>, scalar_prefetch = 0 : i64, scratch_operands = 1 : i64, tpu.core_type = #tpu.core_type<tc>, window_params = [{transform_indices = @transform_0, window_bounds = array<i64: 256, 256>}, {transform_indices = @transform_1, window_bounds = array<i64: 256, 128>}, {pipeline_mode = #tpu.pipeline_mode<synchronous>, transform_indices = @transform_2, window_bounds = array<i64: 128, 256>}, {pipeline_mode = #tpu.pipeline_mode<synchronous>, transform_indices = @transform_3, window_bounds = array<i64: 1, 256>}, {transform_indices = @transform_4, window_bounds = array<i64: 256, 256>}]} {
    %c0_i32 = arith.constant 0 : i32
    %0 = arith.cmpi eq, %arg1, %c0_i32 : i32
    %1 = arith.extui %0 : i1 to i32
    %c0_i32_0 = arith.constant 0 : i32
    %2 = arith.cmpi ne, %1, %c0_i32_0 : i32
    scf.if %2 {
      %cst_9 = arith.constant 0.000000e+00 : f32
      %12 = vector.broadcast %cst_9 : f32 to vector<256x128xf32>
      %c0_10 = arith.constant 0 : index
      %c0_11 = arith.constant 0 : index
      %13 = vector.load %arg7[%c0_10, %c0_11] : memref<256x128xf32, #tpu.memory_space<vmem>>, vector<256x128xf32>
      tpu.vector_store %arg7[%c0_10, %c0_11], %12 {strides = array<i32>} : memref<256x128xf32, #tpu.memory_space<vmem>>, vector<256x128xf32>,
    } else {
    }
    %c0 = arith.constant 0 : index
    %c0_1 = arith.constant 0 : index
    %3 = vector.load %arg7[%c0, %c0_1] : memref<256x128xf32, #tpu.memory_space<vmem>>, vector<256x128xf32>
    %c0_2 = arith.constant 0 : index
    %c0_3 = arith.constant 0 : index
    %4 = vector.load %arg2[%c0_2, %c0_3] : memref<256x256xbf16, #tpu.memory_space<vmem>>, vector<256x256xbf16>
    %c0_4 = arith.constant 0 : index
    %c0_5 = arith.constant 0 : index
    %5 = vector.load %arg3[%c0_4, %c0_5] : memref<256x128xbf16, #tpu.memory_space<vmem>>, vector<256x128xbf16>
    %cst = arith.constant dense<0.000000e+00> : vector<256x128xf32>
    %6 = tpu.matmul %4, %5, %cst {dimension_numbers = #tpu.dot_dimension_numbers<[1], [0], [0], [1], [0, 0, 1, 1], [], []>} : vector<256x256xbf16>, vector<256x128xbf16>, vector<256x128xf32> -> vector<256x128xf32>
    %7 = arith.addf %3, %6 : vector<256x128xf32>
    %c0_6 = arith.constant 0 : index
    %c0_7 = arith.constant 0 : index
    %8 = vector.load %arg7[%c0_6, %c0_7] : memref<256x128xf32, #tpu.memory_space<vmem>>, vector<256x128xf32>
    tpu.vector_store %arg7[%c0_6, %c0_7], %7 {strides = array<i32>} : memref<256x128xf32, #tpu.memory_space<vmem>>, vector<256x128xf32>,
    %c1_i32 = arith.constant 1 : i32
    %9 = arith.cmpi eq, %arg1, %c1_i32 : i32
    %10 = arith.extui %9 : i1 to i32
    %c0_i32_8 = arith.constant 0 : i32
    %11 = arith.cmpi ne, %10, %c0_i32_8 : i32
    scf.if %11 {
      %c0_9 = arith.constant 0 : index
      %c0_10 = arith.constant 0 : index
      %12 = vector.load %arg7[%c0_9, %c0_10] : memref<256x128xf32, #tpu.memory_space<vmem>>, vector<256x128xf32>
      %13 = arith.truncf %12 : vector<256x128xf32> to vector<256x128xbf16>
      %c0_11 = arith.constant 0 : index
      %c0_12 = arith.constant 0 : index
      %14 = vector.load %arg4[%c0_11, %c0_12] : memref<128x256xbf16, #tpu.memory_space<vmem>>, vector<128x256xbf16>
      %cst_13 = arith.constant dense<0.000000e+00> : vector<256x256xf32>
      %15 = tpu.matmul %13, %14, %cst_13 {dimension_numbers = #tpu.dot_dimension_numbers<[1], [0], [0], [1], [0, 0, 1, 1], [], []>} : vector<256x128xbf16>, vector<128x256xbf16>, vector<256x256xf32> -> vector<256x256xf32>
      %c0_14 = arith.constant 0 : index
      %c0_15 = arith.constant 0 : index
      %16 = vector.load %arg5[%c0_14, %c0_15] : memref<1x256xf32, #tpu.memory_space<vmem>>, vector<1x256xf32>
      %17 = vector.broadcast %16 : vector<1x256xf32> to vector<256x256xf32>
      %18 = arith.addf %15, %17 : vector<256x256xf32>
      %cst_16 = arith.constant 0.000000e+00 : f32
      %19 = vector.broadcast %cst_16 : f32 to vector<256x256xf32>
      %20 = arith.maximumf %18, %19 : vector<256x256xf32>
      %21 = arith.truncf %20 : vector<256x256xf32> to vector<256x256xbf16>
      %c0_17 = arith.constant 0 : index
      %c0_18 = arith.constant 0 : index
      %22 = vector.load %arg6[%c0_17, %c0_18] : memref<256x256xbf16, #tpu.memory_space<vmem>>, vector<256x256xbf16>
      tpu.vector_store %arg6[%c0_17, %c0_18], %21 {strides = array<i32>} : memref<256x256xbf16, #tpu.memory_space<vmem>>, vector<256x256xbf16>,
    } else {
    }
    return
  }
  func.func @transform_0(%arg0: i32, %arg1: i32) -> (i32, i32) {
    %c0_i32 = arith.constant 0 : i32
    return %arg0, %arg1 : i32, i32
  }
  func.func @transform_1(%arg0: i32, %arg1: i32) -> (i32, i32) {
    %c0_i32 = arith.constant 0 : i32
    %c0_i32_0 = arith.constant 0 : i32
    return %arg1, %c0_i32 : i32, i32
  }
  func.func @transform_2(%arg0: i32, %arg1: i32) -> (i32, i32) {
    %c0_i32 = arith.constant 0 : i32
    %c0_i32_0 = arith.constant 0 : i32
    %c0_i32_1 = arith.constant 0 : i32
    return %c0_i32, %c0_i32_0 : i32, i32
  }
  func.func @transform_3(%arg0: i32, %arg1: i32) -> (i32, i32) {
    %c0_i32 = arith.constant 0 : i32
    %c0_i32_0 = arith.constant 0 : i32
    %c0_i32_1 = arith.constant 0 : i32
    return %c0_i32, %c0_i32_0 : i32, i32
  }
  func.func @transform_4(%arg0: i32, %arg1: i32) -> (i32, i32) {
    %c0_i32 = arith.constant 0 : i32
    %c0_i32_0 = arith.constant 0 : i32
    return %arg0, %c0_i32 : i32, i32
  }
}

</mosaic_0001>

<llo_original>
// kernel: tpu_custom_call.1
$region0: #{tpu_custom_call.1}
  #allocation0 [shape = 'u32[]', space=smem, size = 0x4, offset = 0x4, fixed_abs, tag = 'smem constant byte address 0x4 - core index']
  #allocation1 [shape = 'u32[144,128]{1,0:T(1,128)}', space=vmem, size = 0x12000, scoped, tag = 'internal scratch']
  #allocation2 [shape = 'f32[256,128]{1,0:T(8,128)}', space=vmem, size = 0x20000, scoped, tag = 'scratch operand']
  %s0 = inlined_call_operand.hbm [shape: bf16[512,512], index: 0, kind: input, shape index: {}]
  %s1 = inlined_call_operand.hbm [shape: bf16[512,128], index: 1, kind: input, shape index: {}]
  %s2 = inlined_call_operand.hbm [shape: bf16[128,256], index: 2, kind: input, shape index: {}]
  %s3 = inlined_call_operand.vmem [shape: f32[1,256], index: 3, kind: input, shape index: {}]
  %s4 = inlined_call_operand.hbm [shape: bf16[512,256], index: 4, kind: output, shape index: {}]
  %s5 = sld [smem:[#allocation0]]
  $region69: #{tpu_custom_call.1} parent=0
    _
  %s7 = ssub.s32 1, %s5
  %s8 = scalar_select 0, %s7, %s5
  $region1: #{tpu_custom_call.1} parent=0
    #allocation3 [shape = 'u8[262144]{0}', space=vmem, size = 0x40000, scoped, tag = 'input window, operand 0']
    #allocation4 [shape = 's32[2]{0}', space=sflag, size = 0x8, scoped, tag = 'scoped memory for tpu_custom_call.1']
    #allocation5 [shape = 's32[2]{0}', space=sflag, size = 0x8, scoped, tag = 'scoped memory for tpu_custom_call.1']
    #allocation6 [shape = 'u8[131072]{0}', space=vmem, size = 0x20000, scoped, tag = 'input window, operand 1']
    #allocation7 [shape = 's32[2]{0}', space=sflag, size = 0x8, scoped, tag = 'scoped memory for tpu_custom_call.1']
    #allocation8 [shape = 'u8[65536]{0}', space=vmem, size = 0x10000, scoped, tag = 'input window, operand 2, single buffered']
    #allocation9 [shape = 'u8[262144]{0}', space=vmem, size = 0x40000, scoped, tag = 'output window, operand 0']
    %9 = vsyncpa [#allocation4], 0
    %s10 = scalar_lea.sflag [#allocation4], 1
    %11 = vsyncpa %s10, 0
    %12 = vsyncpa [#allocation7], 0
    %s13 = scalar_lea.sflag [#allocation7], 1
    %14 = vsyncpa %s13, 0
    %15 = vsyncpa [#allocation5], 0
    %s16 = scalar_lea.sflag [#allocation5], 1
    %17 = vsyncpa %s16, 0
    loop: start=0, step=1, limit=6
    $region2: #{tpu_custom_call.1} parent=1 // loop_pre_header
      _
    $region3: #{tpu_custom_call.1} parent=1 // loop_header
      %s19 = sphi 0, %s23
      %p20 = scmp.ge.s32.totalorder %s19, 6
      %s26 = sphi 0, %s38
      %s27 = sphi 0, %s34
      %s28 = sphi 0, %s26
      %s29 = sphi 0, %s27
      %s30 = sphi 0, %s28
      %s31 = sphi 0, %s29
      %s43 = sphi 0, %s45
      %s46 = sphi 0, %s43
      %s47 = sphi 0, %s46
      %s63 = sphi 0, %s47
      %s69 = sphi 0, %s71
      %s72 = sphi 0, %s69
      %s73 = sphi 0, %s72
      %s89 = sphi 0, %s73
      %s93 = sphi 0, %s93
      %s95 = sphi 0, %s93
      %s96 = sphi 0, %s95
      %s110 = sphi 0, %s96
      %s114 = sphi 0, %s114
      %s116 = sphi 0, %s114
      %s117 = sphi 0, %s116
      %s131 = sphi 0, %s117
      %s137 = sphi 0, %s139
      %s140 = sphi 0, %s137
      %s141 = sphi 0, %s140
      %s157 = sphi 0, %s141
    $region4: #{tpu_custom_call.1} parent=1 // loop_header_branch
      %22 = sbr.rel (%p20) target = $region8
    $region5: #{tpu_custom_call.1} parent=1 // loop_body
      %s24 = ssub.s32 %s19, 1
      %s25 = ssub.s32 %s19, 2
      %s32 = sadd.s32 1, %s27
      %p33 = scmp.ge.s32.totalorder %s32, 2
      %s34 = scalar_select %p33, 0, %s32
      %s35 = sadd.s32 1, %s26
      %s36 = scalar_select %p33, %s35, %s26
      %p37 = scmp.ge.s32.totalorder %s36, 2
      %s38 = scalar_select %p37, 0, %s36
      %s39 = ssub.s32 %s26, %s38
      %s40 = ssub.s32 %s27, %s34
      %s41 = sor.u32 %s39, %s40
      %p42 = scmp.eq.s32.totalorder %s41, 0
      %s44 = sadd.s32 %s43, 1
      %s45 = scalar_select %p42, %s43, %s44
      %p48 = pneg %p42
      %p49 = scmp.eq.s32.totalorder %s19, 3
      %p50 = por %p48, %p49
      %p51 = scmp.ne.s32.totalorder %s43, %s46
      %p52 = scmp.eq.s32.totalorder %s19, 0
      %p53 = por %p51, %p52
      %p54 = scmp.ne.s32.totalorder %s43, %s46
      %p55 = scmp.eq.s32.totalorder %s24, 3
      %p56 = por %p54, %p55
      %p57 = scmp.ne.s32.totalorder %s46, %s47
      %p58 = scmp.eq.s32.totalorder %s24, 0
      %p59 = por %p57, %p58
      %p60 = scmp.ne.s32.totalorder %s46, %s47
      %p61 = scmp.eq.s32.totalorder %s25, 3
      %p62 = por %p60, %p61
      %p64 = scmp.ne.s32.totalorder %s47, %s63
      %p65 = scmp.eq.s32.totalorder %s25, 0
      %p66 = por %p64, %p65
      %s67 = ssub.s32 %s27, %s34
      %p68 = scmp.eq.s32.totalorder %s67, 0
      %s70 = sadd.s32 %s69, 1
      %s71 = scalar_select %p68, %s69, %s70
      %p74 = pneg %p68
      %p75 = scmp.eq.s32.totalorder %s19, 3
      %p76 = por %p74, %p75
      %p77 = scmp.ne.s32.totalorder %s69, %s72
      %p78 = scmp.eq.s32.totalorder %s19, 0
      %p79 = por %p77, %p78
      %p80 = scmp.ne.s32.totalorder %s69, %s72
      %p81 = scmp.eq.s32.totalorder %s24, 3
      %p82 = por %p80, %p81
      %p83 = scmp.ne.s32.totalorder %s72, %s73
      %p84 = scmp.eq.s32.totalorder %s24, 0
      %p85 = por %p83, %p84
      %p86 = scmp.ne.s32.totalorder %s72, %s73
      %p87 = scmp.eq.s32.totalorder %s25, 3
      %p88 = por %p86, %p87
      %p90 = scmp.ne.s32.totalorder %s73, %s89
      %p91 = scmp.eq.s32.totalorder %s25, 0
      %p92 = por %p90, %p91
      %s94 = sadd.s32 %s93, 1
      %p97 = scmp.eq.s32.totalorder %s19, 3
      %p98 = scmp.ne.s32.totalorder %s93, %s95
      %p99 = scmp.eq.s32.totalorder %s19, 0
      %p100 = por %p98, %p99
      %p101 = scmp.ne.s32.totalorder %s93, %s95
      %p102 = scmp.eq.s32.totalorder %s24, 3
      %p103 = por %p101, %p102
      %p104 = scmp.ne.s32.totalorder %s95, %s96
      %p105 = scmp.eq.s32.totalorder %s24, 0
      %p106 = por %p104, %p105
      %p107 = scmp.ne.s32.totalorder %s95, %s96
      %p108 = scmp.eq.s32.totalorder %s25, 3
      %p109 = por %p107, %p108
      %p111 = scmp.ne.s32.totalorder %s96, %s110
      %p112 = scmp.eq.s32.totalorder %s25, 0
      %p113 = por %p111, %p112
      %s115 = sadd.s32 %s114, 1
      %p118 = scmp.eq.s32.totalorder %s19, 3
      %p119 = scmp.ne.s32.totalorder %s114, %s116
      %p120 = scmp.eq.s32.totalorder %s19, 0
      %p121 = por %p119, %p120
      %p122 = scmp.ne.s32.totalorder %s114, %s116
      %p123 = scmp.eq.s32.totalorder %s24, 3
      %p124 = por %p122, %p123
      %p125 = scmp.ne.s32.totalorder %s116, %s117
      %p126 = scmp.eq.s32.totalorder %s24, 0
      %p127 = por %p125, %p126
      %p128 = scmp.ne.s32.totalorder %s116, %s117
      %p129 = scmp.eq.s32.totalorder %s25, 3
      %p130 = por %p128, %p129
      %p132 = scmp.ne.s32.totalorder %s117, %s131
      %p133 = scmp.eq.s32.totalorder %s25, 0
      %p134 = por %p132, %p133
      %s135 = ssub.s32 %s26, %s38
      %p136 = scmp.eq.s32.totalorder %s135, 0
      %s138 = sadd.s32 %s137, 1
      %s139 = scalar_select %p136, %s137, %s138
      %p142 = pneg %p136
      %p143 = scmp.eq.s32.totalorder %s19, 3
      %p144 = por %p142, %p143
      %p145 = scmp.ne.s32.totalorder %s137, %s140
      %p146 = scmp.eq.s32.totalorder %s19, 0
      %p147 = por %p145, %p146
      %p148 = scmp.ne.s32.totalorder %s137, %s140
      %p149 = scmp.eq.s32.totalorder %s24, 3
      %p150 = por %p148, %p149
      %p151 = scmp.ne.s32.totalorder %s140, %s141
      %p152 = scmp.eq.s32.totalorder %s24, 0
      %p153 = por %p151, %p152
      %p154 = scmp.ne.s32.totalorder %s140, %s141
      %p155 = scmp.eq.s32.totalorder %s25, 3
      %p156 = por %p154, %p155
      %p158 = scmp.ne.s32.totalorder %s141, %s157
      %p159 = scmp.eq.s32.totalorder %s25, 0
      %p160 = por %p158, %p159
      %p161 = scmp.le.s32.totalorder 1, %s19
      %p162 = scmp.lt.s32.totalorder %s19, 5
      %p163 = pnand %p161, %p162
      %p164 = pneg %p163
      // Predicated region
      $region9: #{tpu_custom_call.1} parent=5 // pred_check
        _
      $region10: #{tpu_custom_call.1} parent=5 // pred_check_branch
        %166 = sbr.rel (%p163) target = $region12
      $region11: #{tpu_custom_call.1} parent=5 // pred_region
        %s167 = ssub.s32 %s19, 1
        // Predicated region
        $region13: #{tpu_custom_call.1} parent=11 // pred_check
          %p168 = pneg %p106
        $region14: #{tpu_custom_call.1} parent=11 // pred_check_branch
          %170 = sbr.rel (%p168) target = $region16
        $region15: #{tpu_custom_call.1} parent=11 // pred_region
          %s172 = ssub.s32 2048, 2048
          %173 = vsyncadd [#allocation7], %s172
          %s174 = sshll.u32 [#allocation8], 4
          %s175 = int_to_ptr.vmem [resolvable:$true] %s174
          %180 = dma.hbm_to_vmem [thread:$0]  %s2, 2048, %s175, [#allocation7], 128, 128, 8
        $region16: #{tpu_custom_call.1} parent=11 // pred_fallthru
          _
        // Predicated region
        $region17: #{tpu_custom_call.1} parent=11 // pred_check
          %p181 = pneg %p127
        $region18: #{tpu_custom_call.1} parent=11 // pred_check_branch
          %183 = sbr.rel (%p181) target = $region20
        $region19: #{tpu_custom_call.1} parent=11 // pred_region
          _
        $region20: #{tpu_custom_call.1} parent=11 // pred_fallthru
          _
      $region12: #{tpu_custom_call.1} parent=5 // pred_fallthru
        _
      %p184 = scmp.lt.s32.totalorder %s19, 4
      // Predicated region
      $region21: #{tpu_custom_call.1} parent=5 // pred_check
        %p185 = pneg %p184
      $region22: #{tpu_custom_call.1} parent=5 // pred_check_branch
        %187 = sbr.rel (%p185) target = $region24
      $region23: #{tpu_custom_call.1} parent=5 // pred_region
        // Predicated region
        $region25: #{tpu_custom_call.1} parent=23 // pred_check
          %p188 = pneg %p53
        $region26: #{tpu_custom_call.1} parent=23 // pred_check_branch
          %190 = sbr.rel (%p188) target = $region28
        $region27: #{tpu_custom_call.1} parent=23 // pred_region
          %s191 = sand.u32 %s43, 1
          %s192 = scalar_lea.sflag [#allocation4], %s191
          %s193 = sand.u32 %s43, 1
          %s194 = smul.addr %s193, 256
          %s195 = scalar_lea.vmem [#allocation3], %s194
          %s196 = smul.u32 32, %s26
          %s197 = smul.u32 2, %s27
          %s199 = ssub.s32 4096, 4096
          %200 = vsyncadd %s192, %s199
          %s201 = smul.addr %s196, 4
          %s202 = sadd.s32 %s197, %s201
          %s203 = smul.addr %s202, 64
          %s204 = scalar_lea.hbm %s0, %s203
          %s205 = sshll.u32 %s195, 4
          %s206 = int_to_ptr.vmem [resolvable:$true] %s205
          %211 = dma.hbm_to_vmem [thread:$0]  %s204, 4096, %s206, %s192, 256, 128, 8
        $region28: #{tpu_custom_call.1} parent=23 // pred_fallthru
          _
        // Predicated region
        $region29: #{tpu_custom_call.1} parent=23 // pred_check
          %p212 = pneg %p79
        $region30: #{tpu_custom_call.1} parent=23 // pred_check_branch
          %214 = sbr.rel (%p212) target = $region32
        $region31: #{tpu_custom_call.1} parent=23 // pred_region
          %s215 = sand.u32 %s19, 1
          %s216 = scalar_lea.sflag [#allocation7], %s215
          %s217 = sand.u32 %s69, 1
          %s218 = smul.addr %s217, 128
          %s219 = scalar_lea.vmem [#allocation6], %s218
          %s220 = smul.u32 32, %s27
          %s222 = ssub.s32 2048, 2048
          %223 = vsyncadd %s216, %s222
          %s224 = smul.addr %s220, 64
          %s225 = scalar_lea.hbm %s1, %s224
          %s226 = sshll.u32 %s219, 4
          %s227 = int_to_ptr.vmem [resolvable:$true] %s226
          %232 = dma.hbm_to_vmem [thread:$0]  %s225, 2048, %s227, %s216, 64, 64, 4
        $region32: #{tpu_custom_call.1} parent=23 // pred_fallthru
          _
      $region24: #{tpu_custom_call.1} parent=5 // pred_fallthru
        _
      %p233 = scmp.le.s32.totalorder 1, %s19
      %p234 = scmp.lt.s32.totalorder %s19, 5
      %p235 = pnand %p233, %p234
      %p236 = pneg %p235
      // Predicated region
      $region33: #{tpu_custom_call.1} parent=5 // pred_check
        _
      $region34: #{tpu_custom_call.1} parent=5 // pred_check_branch
        %238 = sbr.rel (%p235) target = $region36
      $region35: #{tpu_custom_call.1} parent=5 // pred_region
        %s239 = ssub.s32 %s19, 1
        %s240 = sand.u32 %s46, 1
        %s241 = scalar_lea.sflag [#allocation4], %s240
        %s242 = sand.u32 %s46, 1
        %s243 = smul.addr %s242, 256
        %s244 = scalar_lea.vmem [#allocation3], %s243
        // Predicated region
        $region37: #{tpu_custom_call.1} parent=35 // pred_check
          %p245 = pneg %p59
        $region38: #{tpu_custom_call.1} parent=35 // pred_check_branch
          %247 = sbr.rel (%p245) target = $region40
        $region39: #{tpu_custom_call.1} parent=35 // pred_region
          %248 = dma.done %s241, 4096
        $region40: #{tpu_custom_call.1} parent=35 // pred_fallthru
          _
        %s249 = sand.u32 %s24, 1
        %s250 = scalar_lea.sflag [#allocation7], %s249
        %s251 = sand.u32 %s72, 1
        %s252 = smul.addr %s251, 128
        %s253 = scalar_lea.vmem [#allocation6], %s252
        // Predicated region
        $region41: #{tpu_custom_call.1} parent=35 // pred_check
          %p254 = pneg %p85
        $region42: #{tpu_custom_call.1} parent=35 // pred_check_branch
          %256 = sbr.rel (%p254) target = $region44
        $region43: #{tpu_custom_call.1} parent=35 // pred_region
          %257 = dma.done %s250, 2048
        $region44: #{tpu_custom_call.1} parent=35 // pred_fallthru
          _
        // Predicated region
        $region45: #{tpu_custom_call.1} parent=35 // pred_check
          %p258 = pneg %p106
        $region46: #{tpu_custom_call.1} parent=35 // pred_check_branch
          %260 = sbr.rel (%p258) target = $region48
        $region47: #{tpu_custom_call.1} parent=35 // pred_region
          %261 = dma.done [#allocation7], 2048
        $region48: #{tpu_custom_call.1} parent=35 // pred_fallthru
          _
        %s262 = sand.u32 %s46, 1
        %s263 = scalar_lea.sflag [#allocation4], %s262
        %s264 = sand.u32 %s46, 1
        %s265 = smul.addr %s264, 256
        %s266 = scalar_lea.vmem [#allocation3], %s265
        %p267 = pneg %p59
        %p268 = pneg %p56
        %s269 = sand.u32 %s24, 1
        %s270 = scalar_lea.sflag [#allocation7], %s269
        %s271 = sand.u32 %s72, 1
        %s272 = smul.addr %s271, 128
        %s273 = scalar_lea.vmem [#allocation6], %s272
        %p274 = pneg %p85
        %p275 = pneg %p82
        %p276 = pneg %p106
        %p277 = pneg %p103
        %p278 = pneg %p127
        %p279 = pneg %p124
        %p280 = pneg %p153
        %p281 = pneg %p150
        %s282 = sand.u32 %s140, 1
        %s283 = scalar_lea.sflag [#allocation5], %s282
        %s284 = sand.u32 %s140, 1
        %s285 = smul.addr %s284, 256
        %s286 = scalar_lea.vmem [#allocation9], %s285
        %s287 = smul.u32 32, %s28
        %s288 = smul.u32 2, %s29
        %s289 = smul.u32 32, %s29
        %s290 = smul.u32 32, %s28
        %p292 = scmp.eq.s32.totalorder %s29, 0
        // Predicated region
        $region49: #{tpu_custom_call.1} parent=35 // pred_check
          %p293 = pneg %p292
        $region50: #{tpu_custom_call.1} parent=35 // pred_check_branch
          %295 = sbr.rel (%p293) target = $region52
        $region51: #{tpu_custom_call.1} parent=35 // pred_region
          %296 = vst [vmem:[#allocation2] sm:$0xff] 0.0
          %297 = vst [vmem:[#allocation2 + $0x8] sm:$0xff] 0.0
          %298 = vst [vmem:[#allocation2 + $0x10] sm:$0xff] 0.0
          %299 = vst [vmem:[#allocation2 + $0x18] sm:$0xff] 0.0
          %300 = vst [vmem:[#allocation2 + $0x20] sm:$0xff] 0.0
          %301 = vst [vmem:[#allocation2 + $0x28] sm:$0xff] 0.0
          %302 = vst [vmem:[#allocation2 + $0x30] sm:$0xff] 0.0
          %303 = vst [vmem:[#allocation2 + $0x38] sm:$0xff] 0.0
          %304 = vst [vmem:[#allocation2 + $0x40] sm:$0xff] 0.0
          %305 = vst [vmem:[#allocation2 + $0x48] sm:$0xff] 0.0
          %306 = vst [vmem:[#allocation2 + $0x50] sm:$0xff] 0.0
          %307 = vst [vmem:[#allocation2 + $0x58] sm:$0xff] 0.0
          %308 = vst [vmem:[#allocation2 + $0x60] sm:$0xff] 0.0
          %309 = vst [vmem:[#allocation2 + $0x68] sm:$0xff] 0.0
          %310 = vst [vmem:[#allocation2 + $0x70] sm:$0xff] 0.0
          %311 = vst [vmem:[#allocation2 + $0x78] sm:$0xff] 0.0
          %312 = vst [vmem:[#allocation2 + $0x80] sm:$0xff] 0.0
          %313 = vst [vmem:[#allocation2 + $0x88] sm:$0xff] 0.0
          %314 = vst [vmem:[#allocation2 + $0x90] sm:$0xff] 0.0
          %315 = vst [vmem:[#allocation2 + $0x98] sm:$0xff] 0.0
          %316 = vst [vmem:[#allocation2 + $0xa0] sm:$0xff] 0.0
          %317 = vst [vmem:[#allocation2 + $0xa8] sm:$0xff] 0.0
          %318 = vst [vmem:[#allocation2 + $0xb0] sm:$0xff] 0.0
          %319 = vst [vmem:[#allocation2 + $0xb8] sm:$0xff] 0.0
          %320 = vst [vmem:[#allocation2 + $0xc0] sm:$0xff] 0.0
          %321 = vst [vmem:[#allocation2 + $0xc8] sm:$0xff] 0.0
          %322 = vst [vmem:[#allocation2 + $0xd0] sm:$0xff] 0.0
          %323 = vst [vmem:[#allocation2 + $0xd8] sm:$0xff] 0.0
          %324 = vst [vmem:[#allocation2 + $0xe0] sm:$0xff] 0.0
          %325 = vst [vmem:[#allocation2 + $0xe8] sm:$0xff] 0.0
          %326 = vst [vmem:[#allocation2 + $0xf0] sm:$0xff] 0.0
          %327 = vst [vmem:[#allocation2 + $0xf8] sm:$0xff] 0.0
        $region52: #{tpu_custom_call.1} parent=35 // pred_fallthru
          _
        %v328 = vld [vmem:[#allocation2] sm:$0xff]
        %v329 = vld [vmem:[#allocation2 + $0x8] sm:$0xff]
        %v330 = vld [vmem:[#allocation2 + $0x10] sm:$0xff]
        %v331 = vld [vmem:[#allocation2 + $0x18] sm:$0xff]
        %v332 = vld [vmem:[#allocation2 + $0x20] sm:$0xff]
        %v333 = vld [vmem:[#allocation2 + $0x28] sm:$0xff]
        %v334 = vld [vmem:[#allocation2 + $0x30] sm:$0xff]
        %v335 = vld [vmem:[#allocation2 + $0x38] sm:$0xff]
        %v336 = vld [vmem:[#allocation2 + $0x40] sm:$0xff]
        %v337 = vld [vmem:[#allocation2 + $0x48] sm:$0xff]
        %v338 = vld [vmem:[#allocation2 + $0x50] sm:$0xff]
        %v339 = vld [vmem:[#allocation2 + $0x58] sm:$0xff]
        %v340 = vld [vmem:[#allocation2 + $0x60] sm:$0xff]
        %v341 = vld [vmem:[#allocation2 + $0x68] sm:$0xff]
        %v342 = vld [vmem:[#allocation2 + $0x70] sm:$0xff]
        %v343 = vld [vmem:[#allocation2 + $0x78] sm:$0xff]
        %v344 = vld [vmem:[#allocation2 + $0x80] sm:$0xff]
        %v345 = vld [vmem:[#allocation2 + $0x88] sm:$0xff]
        %v346 = vld [vmem:[#allocation2 + $0x90] sm:$0xff]
        %v347 = vld [vmem:[#allocation2 + $0x98] sm:$0xff]
        %v348 = vld [vmem:[#allocation2 + $0xa0] sm:$0xff]
        %v349 = vld [vmem:[#allocation2 + $0xa8] sm:$0xff]
        %v350 = vld [vmem:[#allocation2 + $0xb0] sm:$0xff]
        %v351 = vld [vmem:[#allocation2 + $0xb8] sm:$0xff]
        %v352 = vld [vmem:[#allocation2 + $0xc0] sm:$0xff]
        %v353 = vld [vmem:[#allocation2 + $0xc8] sm:$0xff]
        %v354 = vld [vmem:[#allocation2 + $0xd0] sm:$0xff]
        %v355 = vld [vmem:[#allocation2 + $0xd8] sm:$0xff]
        %v356 = vld [vmem:[#allocation2 + $0xe0] sm:$0xff]
        %v357 = vld [vmem:[#allocation2 + $0xe8] sm:$0xff]
        %v358 = vld [vmem:[#allocation2 + $0xf0] sm:$0xff]
        %v359 = vld [vmem:[#allocation2 + $0xf8] sm:$0xff]
        %v360 = vld [vmem:[%s244] sm:$0xff]
        %v361 = vld [vmem:[%s244 + $0x8] sm:$0xff]
        %v362 = vld [vmem:[%s244 + $0x10] sm:$0xff]
        %v363 = vld [vmem:[%s244 + $0x18] sm:$0xff]
        %v364 = vld [vmem:[%s244 + $0x20] sm:$0xff]
        %v365 = vld [vmem:[%s244 + $0x28] sm:$0xff]
        %v366 = vld [vmem:[%s244 + $0x30] sm:$0xff]
        %v367 = vld [vmem:[%s244 + $0x38] sm:$0xff]
        %v368 = vld [vmem:[%s244 + $0x40] sm:$0xff]
        %v369 = vld [vmem:[%s244 + $0x48] sm:$0xff]
        %v370 = vld [vmem:[%s244 + $0x50] sm:$0xff]
        %v371 = vld [vmem:[%s244 + $0x58] sm:$0xff]
        %v372 = vld [vmem:[%s244 + $0x60] sm:$0xff]
        %v373 = vld [vmem:[%s244 + $0x68] sm:$0xff]
        %v374 = vld [vmem:[%s244 + $0x70] sm:$0xff]
        %v375 = vld [vmem:[%s244 + $0x78] sm:$0xff]
        %v376 = vld [vmem:[%s244 + $0x80] sm:$0xff]
        %v377 = vld [vmem:[%s244 + $0x88] sm:$0xff]
        %v378 = vld [vmem:[%s244 + $0x90] sm:$0xff]
        %v379 = vld [vmem:[%s244 + $0x98] sm:$0xff]
        %v380 = vld [vmem:[%s244 + $0xa0] sm:$0xff]
        %v381 = vld [vmem:[%s244 + $0xa8] sm:$0xff]
        %v382 = vld [vmem:[%s244 + $0xb0] sm:$0xff]
        %v383 = vld [vmem:[%s244 + $0xb8] sm:$0xff]
        %v384 = vld [vmem:[%s244 + $0xc0] sm:$0xff]
        %v385 = vld [vmem:[%s244 + $0xc8] sm:$0xff]
        %v386 = vld [vmem:[%s244 + $0xd0] sm:$0xff]
        %v387 = vld [vmem:[%s244 + $0xd8] sm:$0xff]
        %v388 = vld [vmem:[%s244 + $0xe0] sm:$0xff]
        %v389 = vld [vmem:[%s244 + $0xe8] sm:$0xff]
        %v390 = vld [vmem:[%s244 + $0xf0] sm:$0xff]
        %v391 = vld [vmem:[%s244 + $0xf8] sm:$0xff]
        %v392 = vld [vmem:[%s253] sm:$0xf]
        %v393 = vld [vmem:[%s253 + $0x4] sm:$0xf]
        %v394 = vld [vmem:[%s253 + $0x8] sm:$0xf]
        %v395 = vld [vmem:[%s253 + $0xc] sm:$0xf]
        %v396 = vld [vmem:[%s253 + $0x10] sm:$0xf]
        %v397 = vld [vmem:[%s253 + $0x14] sm:$0xf]
        %v398 = vld [vmem:[%s253 + $0x18] sm:$0xf]
        %v399 = vld [vmem:[%s253 + $0x1c] sm:$0xf]
        %v400 = vld [vmem:[%s253 + $0x20] sm:$0xf]
        %v401 = vld [vmem:[%s253 + $0x24] sm:$0xf]
        %v402 = vld [vmem:[%s253 + $0x28] sm:$0xf]
        %v403 = vld [vmem:[%s253 + $0x2c] sm:$0xf]
        %v404 = vld [vmem:[%s253 + $0x30] sm:$0xf]
        %v405 = vld [vmem:[%s253 + $0x34] sm:$0xf]
        %v406 = vld [vmem:[%s253 + $0x38] sm:$0xf]
        %v407 = vld [vmem:[%s253 + $0x3c] sm:$0xf]
        %v408 = vld [vmem:[%s253 + $0x40] sm:$0xf]
        %v409 = vld [vmem:[%s253 + $0x44] sm:$0xf]
        %v410 = vld [vmem:[%s253 + $0x48] sm:$0xf]
        %v411 = vld [vmem:[%s253 + $0x4c] sm:$0xf]
        %v412 = vld [vmem:[%s253 + $0x50] sm:$0xf]
        %v413 = vld [vmem:[%s253 + $0x54] sm:$0xf]
        %v414 = vld [vmem:[%s253 + $0x58] sm:$0xf]
        %v415 = vld [vmem:[%s253 + $0x5c] sm:$0xf]
        %v416 = vld [vmem:[%s253 + $0x60] sm:$0xf]
        %v417 = vld [vmem:[%s253 + $0x64] sm:$0xf]
        %v418 = vld [vmem:[%s253 + $0x68] sm:$0xf]
        %v419 = vld [vmem:[%s253 + $0x6c] sm:$0xf]
        %v420 = vld [vmem:[%s253 + $0x70] sm:$0xf]
        %v421 = vld [vmem:[%s253 + $0x74] sm:$0xf]
        %v422 = vld [vmem:[%s253 + $0x78] sm:$0xf]
        %v423 = vld [vmem:[%s253 + $0x7c] sm:$0xf]
        %v456 = vunpack.c.l.b16 %v360
        %v457 = vunpack.c.h.b16 %v360
        %v458 = vunpack.c.l.b16 %v361
        %v459 = vunpack.c.h.b16 %v361
        %v460 = vunpack.c.l.b16 %v362
        %v461 = vunpack.c.h.b16 %v362
        %v462 = vunpack.c.l.b16 %v363
        %v463 = vunpack.c.h.b16 %v363
        %v464 = vunpack.c.l.b16 %v364
        %v465 = vunpack.c.h.b16 %v364
        %v466 = vunpack.c.l.b16 %v365
        %v467 = vunpack.c.h.b16 %v365
        %v468 = vunpack.c.l.b16 %v366
        %v469 = vunpack.c.h.b16 %v366
        %v470 = vunpack.c.l.b16 %v367
        %v471 = vunpack.c.h.b16 %v367
        %v472 = vunpack.c.l.b16 %v368
        %v473 = vunpack.c.h.b16 %v368
        %v474 = vunpack.c.l.b16 %v369
        %v475 = vunpack.c.h.b16 %v369
        %v476 = vunpack.c.l.b16 %v370
        %v477 = vunpack.c.h.b16 %v370
        %v478 = vunpack.c.l.b16 %v371
        %v479 = vunpack.c.h.b16 %v371
        %v480 = vunpack.c.l.b16 %v372
        %v481 = vunpack.c.h.b16 %v372
        %v482 = vunpack.c.l.b16 %v373
        %v483 = vunpack.c.h.b16 %v373
        %v484 = vunpack.c.l.b16 %v374
        %v485 = vunpack.c.h.b16 %v374
        %v486 = vunpack.c.l.b16 %v375
        %v487 = vunpack.c.h.b16 %v375
        %v488 = vunpack.c.l.b16 %v376
        %v489 = vunpack.c.h.b16 %v376
        %v490 = vunpack.c.l.b16 %v377
        %v491 = vunpack.c.h.b16 %v377
        %v492 = vunpack.c.l.b16 %v378
        %v493 = vunpack.c.h.b16 %v378
        %v494 = vunpack.c.l.b16 %v379
        %v495 = vunpack.c.h.b16 %v379
        %v496 = vunpack.c.l.b16 %v380
        %v497 = vunpack.c.h.b16 %v380
        %v498 = vunpack.c.l.b16 %v381
        %v499 = vunpack.c.h.b16 %v381
        %v500 = vunpack.c.l.b16 %v382
        %v501 = vunpack.c.h.b16 %v382
        %v502 = vunpack.c.l.b16 %v383
        %v503 = vunpack.c.h.b16 %v383
        %v504 = vunpack.c.l.b16 %v384
        %v505 = vunpack.c.h.b16 %v384
        %v506 = vunpack.c.l.b16 %v385
        %v507 = vunpack.c.h.b16 %v385
        %v508 = vunpack.c.l.b16 %v386
        %v509 = vunpack.c.h.b16 %v386
        %v510 = vunpack.c.l.b16 %v387
        %v511 = vunpack.c.h.b16 %v387
        %v512 = vunpack.c.l.b16 %v388
        %v513 = vunpack.c.h.b16 %v388
        %v514 = vunpack.c.l.b16 %v389
        %v515 = vunpack.c.h.b16 %v389
        %v516 = vunpack.c.l.b16 %v390
        %v517 = vunpack.c.h.b16 %v390
        %v518 = vunpack.c.l.b16 %v391
        %v519 = vunpack.c.h.b16 %v391
        %v520 = vpack.c.b16 %v458, %v456
        %v521 = vpack.c.b16 %v459, %v457
        %v522 = vpack.c.b16 %v462, %v460
        %v523 = vpack.c.b16 %v463, %v461
        %v524 = vpack.c.b16 %v466, %v464
        %v525 = vpack.c.b16 %v467, %v465
        %v526 = vpack.c.b16 %v470, %v468
        %v527 = vpack.c.b16 %v471, %v469
        %v528 = vpack.c.b16 %v474, %v472
        %v529 = vpack.c.b16 %v475, %v473
        %v530 = vpack.c.b16 %v478, %v476
        %v531 = vpack.c.b16 %v479, %v477
        %v532 = vpack.c.b16 %v482, %v480
        %v533 = vpack.c.b16 %v483, %v481
        %v534 = vpack.c.b16 %v486, %v484
        %v535 = vpack.c.b16 %v487, %v485
        %v536 = vpack.c.b16 %v490, %v488
        %v537 = vpack.c.b16 %v491, %v489
        %v538 = vpack.c.b16 %v494, %v492
        %v539 = vpack.c.b16 %v495, %v493
        %v540 = vpack.c.b16 %v498, %v496
        %v541 = vpack.c.b16 %v499, %v497
        %v542 = vpack.c.b16 %v502, %v500
        %v543 = vpack.c.b16 %v503, %v501
        %v544 = vpack.c.b16 %v506, %v504
        %v545 = vpack.c.b16 %v507, %v505
        %v546 = vpack.c.b16 %v510, %v508
        %v547 = vpack.c.b16 %v511, %v509
        %v548 = vpack.c.b16 %v514, %v512
        %v549 = vpack.c.b16 %v515, %v513
        %v550 = vpack.c.b16 %v518, %v516
        %v551 = vpack.c.b16 %v519, %v517
        %v616 = vunpack.c.l.b16 %v392
        %v617 = vunpack.c.l.b16 %v393
        %v618 = vunpack.c.l.b16 %v394
        %v619 = vunpack.c.l.b16 %v395
        %v620 = vunpack.c.l.b16 %v396
        %v621 = vunpack.c.l.b16 %v397
        %v622 = vunpack.c.l.b16 %v398
        %v623 = vunpack.c.l.b16 %v399
        %v624 = vunpack.c.l.b16 %v400
        %v625 = vunpack.c.l.b16 %v401
        %v626 = vunpack.c.l.b16 %v402
        %v627 = vunpack.c.l.b16 %v403
        %v628 = vunpack.c.l.b16 %v404
        %v629 = vunpack.c.l.b16 %v405
        %v630 = vunpack.c.l.b16 %v406
        %v631 = vunpack.c.l.b16 %v407
        %v632 = vunpack.c.l.b16 %v408
        %v633 = vunpack.c.l.b16 %v409
        %v634 = vunpack.c.l.b16 %v410
        %v635 = vunpack.c.l.b16 %v411
        %v636 = vunpack.c.l.b16 %v412
        %v637 = vunpack.c.l.b16 %v413
        %v638 = vunpack.c.l.b16 %v414
        %v639 = vunpack.c.l.b16 %v415
        %v640 = vunpack.c.l.b16 %v416
        %v641 = vunpack.c.l.b16 %v417
        %v642 = vunpack.c.l.b16 %v418
        %v643 = vunpack.c.l.b16 %v419
        %v644 = vunpack.c.l.b16 %v420
        %v645 = vunpack.c.l.b16 %v421
        %v646 = vunpack.c.l.b16 %v422
        %v647 = vunpack.c.l.b16 %v423
        %v648 = vpack.c.b16 %v617, %v616
        %v649 = vpack.c.b16 %v619, %v618
        %v650 = vpack.c.b16 %v621, %v620
        %v651 = vpack.c.b16 %v623, %v622
        %v652 = vpack.c.b16 %v625, %v624
        %v653 = vpack.c.b16 %v627, %v626
        %v654 = vpack.c.b16 %v629, %v628
        %v655 = vpack.c.b16 %v631, %v630
        %v656 = vpack.c.b16 %v633, %v632
        %v657 = vpack.c.b16 %v635, %v634
        %v658 = vpack.c.b16 %v637, %v636
        %v659 = vpack.c.b16 %v639, %v638
        %v660 = vpack.c.b16 %v641, %v640
        %v661 = vpack.c.b16 %v643, %v642
        %v662 = vpack.c.b16 %v645, %v644
        %v663 = vpack.c.b16 %v647, %v646
        %680 = vmatprep.subr.bf16.mxu0 0
        %681 = vmatpush1.bf16.msra.mxu0 %v655
        %682 = vmatprep.subr.bf16.mxu0 0
        %683 = vmatpush1.bf16.msra.mxu0 %v654
        %684 = vmatprep.subr.bf16.mxu0 0
        %685 = vmatpush1.bf16.msra.mxu0 %v653
        %686 = vmatprep.subr.bf16.mxu0 0
        %687 = vmatpush1.bf16.msra.mxu0 %v652
        %688 = vmatprep.subr.bf16.mxu0 0
        %689 = vmatpush1.bf16.msra.mxu0 %v651
        %690 = vmatprep.subr.bf16.mxu0 0
        %691 = vmatpush1.bf16.msra.mxu0 %v650
        %692 = vmatprep.subr.bf16.mxu0 0
        %693 = vmatpush1.bf16.msra.mxu0 %v649
        %694 = vmatprep.subr.bf16.mxu0 0
        %695 = vmatpush1.bf16.msra.mxu0 %v648
        %696 = vmatprep.subr.bf16.mxu0 0
        %697 = vmatpush2.bf16.msra.mxu0 %v663
        %698 = vmatprep.subr.bf16.mxu0 0
        %699 = vmatpush2.bf16.msra.mxu0 %v662
        %700 = vmatprep.subr.bf16.mxu0 0
        %701 = vmatpush2.bf16.msra.mxu0 %v661
        %702 = vmatprep.subr.bf16.mxu0 0
        %703 = vmatpush2.bf16.msra.mxu0 %v660
        %704 = vmatprep.subr.bf16.mxu0 0
        %705 = vmatpush2.bf16.msra.mxu0 %v659
        %706 = vmatprep.subr.bf16.mxu0 0
        %707 = vmatpush2.bf16.msra.mxu0 %v658
        %708 = vmatprep.subr.bf16.mxu0 0
        %709 = vmatpush2.bf16.msra.mxu0 %v657
        %710 = vmatprep.subr.bf16.mxu0 0
        %711 = vmatpush2.bf16.msra.mxu0 %v656
        %712 = vmatprep.mubr.bf16.mxu0 %v521
        %713 = vmatmul.mubr.bf16.gmra.mxu0 %v520
        %v714 = vpop.f32.mrf.mxu0
        %v715 = vadd.f32 0.0, %v714
        %v716 = vpop.f32.mrf.mxu0
        %v717 = vpop.f32.mrf.mxu0
        %v718 = vadd.f32 0.0, %v717
        %v719 = vpop.f32.mrf.mxu0
        %720 = vmatprep.mubr.bf16.mxu0 %v523
        %721 = vmatmul.mubr.bf16.gmra.mxu0 %v522
        %v722 = vpop.f32.mrf.mxu0
        %v723 = vadd.f32 0.0, %v722
        %v724 = vpop.f32.mrf.mxu0
        %v725 = vpop.f32.mrf.mxu0
        %v726 = vadd.f32 0.0, %v725
        %v727 = vpop.f32.mrf.mxu0
        %728 = vmatprep.mubr.bf16.mxu0 %v525
        %729 = vmatmul.mubr.bf16.gmra.mxu0 %v524
        %v730 = vpop.f32.mrf.mxu0
        %v731 = vadd.f32 0.0, %v730
        %v732 = vpop.f32.mrf.mxu0
        %v733 = vpop.f32.mrf.mxu0
        %v734 = vadd.f32 0.0, %v733
        %v735 = vpop.f32.mrf.mxu0
        %736 = vmatprep.mubr.bf16.mxu0 %v527
        %737 = vmatmul.mubr.bf16.gmra.mxu0 %v526
        %v738 = vpop.f32.mrf.mxu0
        %v739 = vadd.f32 0.0, %v738
        %v740 = vpop.f32.mrf.mxu0
        %v741 = vpop.f32.mrf.mxu0
        %v742 = vadd.f32 0.0, %v741
        %v743 = vpop.f32.mrf.mxu0
        %744 = vmatprep.mubr.bf16.mxu0 %v529
        %745 = vmatmul.mubr.bf16.gmra.mxu0 %v528
        %v746 = vpop.f32.mrf.mxu0
        %v747 = vadd.f32 0.0, %v746
        %v748 = vpop.f32.mrf.mxu0
        %v749 = vpop.f32.mrf.mxu0
        %v750 = vadd.f32 0.0, %v749
        %v751 = vpop.f32.mrf.mxu0
        %752 = vmatprep.mubr.bf16.mxu0 %v531
        %753 = vmatmul.mubr.bf16.gmra.mxu0 %v530
        %v754 = vpop.f32.mrf.mxu0
        %v755 = vadd.f32 0.0, %v754
        %v756 = vpop.f32.mrf.mxu0
        %v757 = vpop.f32.mrf.mxu0
        %v758 = vadd.f32 0.0, %v757
        %v759 = vpop.f32.mrf.mxu0
        %760 = vmatprep.mubr.bf16.mxu0 %v533
        %761 = vmatmul.mubr.bf16.gmra.mxu0 %v532
        %v762 = vpop.f32.mrf.mxu0
        %v763 = vadd.f32 0.0, %v762
        %v764 = vpop.f32.mrf.mxu0
        %v765 = vpop.f32.mrf.mxu0
        %v766 = vadd.f32 0.0, %v765
        %v767 = vpop.f32.mrf.mxu0
        %768 = vmatprep.mubr.bf16.mxu0 %v535
        %769 = vmatmul.mubr.bf16.gmra.mxu0 %v534
        %v770 = vpop.f32.mrf.mxu0
        %v771 = vadd.f32 0.0, %v770
        %v772 = vpop.f32.mrf.mxu0
        %v773 = vpop.f32.mrf.mxu0
        %v774 = vadd.f32 0.0, %v773
        %v775 = vpop.f32.mrf.mxu0
        %776 = vmatprep.mubr.bf16.mxu0 %v537
        %777 = vmatmul.mubr.bf16.gmra.mxu0 %v536
        %v778 = vpop.f32.mrf.mxu0
        %v779 = vadd.f32 0.0, %v778
        %v780 = vpop.f32.mrf.mxu0
        %v781 = vpop.f32.mrf.mxu0
        %v782 = vadd.f32 0.0, %v781
        %v783 = vpop.f32.mrf.mxu0
        %784 = vmatprep.mubr.bf16.mxu0 %v539
        %785 = vmatmul.mubr.bf16.gmra.mxu0 %v538
        %v786 = vpop.f32.mrf.mxu0
        %v787 = vadd.f32 0.0, %v786
        %v788 = vpop.f32.mrf.mxu0
        %v789 = vpop.f32.mrf.mxu0
        %v790 = vadd.f32 0.0, %v789
        %v791 = vpop.f32.mrf.mxu0
        %792 = vmatprep.mubr.bf16.mxu0 %v541
        %793 = vmatmul.mubr.bf16.gmra.mxu0 %v540
        %v794 = vpop.f32.mrf.mxu0
        %v795 = vadd.f32 0.0, %v794
        %v796 = vpop.f32.mrf.mxu0
        %v797 = vpop.f32.mrf.mxu0
        %v798 = vadd.f32 0.0, %v797
        %v799 = vpop.f32.mrf.mxu0
        %800 = vmatprep.mubr.bf16.mxu0 %v543
        %801 = vmatmul.mubr.bf16.gmra.mxu0 %v542
        %v802 = vpop.f32.mrf.mxu0
        %v803 = vadd.f32 0.0, %v802
        %v804 = vpop.f32.mrf.mxu0
        %v805 = vpop.f32.mrf.mxu0
        %v806 = vadd.f32 0.0, %v805
        %v807 = vpop.f32.mrf.mxu0
        %808 = vmatprep.mubr.bf16.mxu0 %v545
        %809 = vmatmul.mubr.bf16.gmra.mxu0 %v544
        %v810 = vpop.f32.mrf.mxu0
        %v811 = vadd.f32 0.0, %v810
        %v812 = vpop.f32.mrf.mxu0
        %v813 = vpop.f32.mrf.mxu0
        %v814 = vadd.f32 0.0, %v813
        %v815 = vpop.f32.mrf.mxu0
        %816 = vmatprep.mubr.bf16.mxu0 %v547
        %817 = vmatmul.mubr.bf16.gmra.mxu0 %v546
        %v818 = vpop.f32.mrf.mxu0
        %v819 = vadd.f32 0.0, %v818
        %v820 = vpop.f32.mrf.mxu0
        %v821 = vpop.f32.mrf.mxu0
        %v822 = vadd.f32 0.0, %v821
        %v823 = vpop.f32.mrf.mxu0
        %824 = vmatprep.mubr.bf16.mxu0 %v549
        %825 = vmatmul.mubr.bf16.gmra.mxu0 %v548
        %v826 = vpop.f32.mrf.mxu0
        %v827 = vadd.f32 0.0, %v826
        %v828 = vpop.f32.mrf.mxu0
        %v829 = vpop.f32.mrf.mxu0
        %v830 = vadd.f32 0.0, %v829
        %v831 = vpop.f32.mrf.mxu0
        %832 = vmatprep.mubr.bf16.mxu0 %v551
        %833 = vmatmul.mubr.bf16.gmra.mxu0 %v550
        %v834 = vpop.f32.mrf.mxu0
        %v835 = vadd.f32 0.0, %v834
        %v836 = vpop.f32.mrf.mxu0
        %v837 = vpop.f32.mrf.mxu0
        %v838 = vadd.f32 0.0, %v837
        %v839 = vpop.f32.mrf.mxu0
        %840 = vdwg.mxu0
        %v841 = vadd.f32 %v328, %v715
        %v842 = vadd.f32 %v329, %v718
        %v843 = vadd.f32 %v330, %v723
        %v844 = vadd.f32 %v331, %v726
        %v845 = vadd.f32 %v332, %v731
        %v846 = vadd.f32 %v333, %v734
        %v847 = vadd.f32 %v334, %v739
        %v848 = vadd.f32 %v335, %v742
        %v849 = vadd.f32 %v336, %v747
        %v850 = vadd.f32 %v337, %v750
        %v851 = vadd.f32 %v338, %v755
        %v852 = vadd.f32 %v339, %v758
        %v853 = vadd.f32 %v340, %v763
        %v854 = vadd.f32 %v341, %v766
        %v855 = vadd.f32 %v342, %v771
        %v856 = vadd.f32 %v343, %v774
        %v857 = vadd.f32 %v344, %v779
        %v858 = vadd.f32 %v345, %v782
        %v859 = vadd.f32 %v346, %v787
        %v860 = vadd.f32 %v347, %v790
        %v861 = vadd.f32 %v348, %v795
        %v862 = vadd.f32 %v349, %v798
        %v863 = vadd.f32 %v350, %v803
        %v864 = vadd.f32 %v351, %v806
        %v865 = vadd.f32 %v352, %v811
        %v866 = vadd.f32 %v353, %v814
        %v867 = vadd.f32 %v354, %v819
        %v868 = vadd.f32 %v355, %v822
        %v869 = vadd.f32 %v356, %v827
        %v870 = vadd.f32 %v357, %v830
        %v871 = vadd.f32 %v358, %v835
        %v872 = vadd.f32 %v359, %v838
        %873 = vst [vmem:[#allocation2] sm:$0xff] %v841
        %874 = vst [vmem:[#allocation2 + $0x8] sm:$0xff] %v842
        %875 = vst [vmem:[#allocation2 + $0x10] sm:$0xff] %v843
        %876 = vst [vmem:[#allocation2 + $0x18] sm:$0xff] %v844
        %877 = vst [vmem:[#allocation2 + $0x20] sm:$0xff] %v845
        %878 = vst [vmem:[#allocation2 + $0x28] sm:$0xff] %v846
        %879 = vst [vmem:[#allocation2 + $0x30] sm:$0xff] %v847
        %880 = vst [vmem:[#allocation2 + $0x38] sm:$0xff] %v848
        %881 = vst [vmem:[#allocation2 + $0x40] sm:$0xff] %v849
        %882 = vst [vmem:[#allocation2 + $0x48] sm:$0xff] %v850
        %883 = vst [vmem:[#allocation2 + $0x50] sm:$0xff] %v851
        %884 = vst [vmem:[#allocation2 + $0x58] sm:$0xff] %v852
        %885 = vst [vmem:[#allocation2 + $0x60] sm:$0xff] %v853
        %886 = vst [vmem:[#allocation2 + $0x68] sm:$0xff] %v854
        %887 = vst [vmem:[#allocation2 + $0x70] sm:$0xff] %v855
        %888 = vst [vmem:[#allocation2 + $0x78] sm:$0xff] %v856
        %889 = vst [vmem:[#allocation2 + $0x80] sm:$0xff] %v857
        %890 = vst [vmem:[#allocation2 + $0x88] sm:$0xff] %v858
        %891 = vst [vmem:[#allocation2 + $0x90] sm:$0xff] %v859
        %892 = vst [vmem:[#allocation2 + $0x98] sm:$0xff] %v860
        %893 = vst [vmem:[#allocation2 + $0xa0] sm:$0xff] %v861
        %894 = vst [vmem:[#allocation2 + $0xa8] sm:$0xff] %v862
        %895 = vst [vmem:[#allocation2 + $0xb0] sm:$0xff] %v863
        %896 = vst [vmem:[#allocation2 + $0xb8] sm:$0xff] %v864
        %897 = vst [vmem:[#allocation2 + $0xc0] sm:$0xff] %v865
        %898 = vst [vmem:[#allocation2 + $0xc8] sm:$0xff] %v866
        %899 = vst [vmem:[#allocation2 + $0xd0] sm:$0xff] %v867
        %900 = vst [vmem:[#allocation2 + $0xd8] sm:$0xff] %v868
        %901 = vst [vmem:[#allocation2 + $0xe0] sm:$0xff] %v869
        %902 = vst [vmem:[#allocation2 + $0xe8] sm:$0xff] %v870
        %903 = vst [vmem:[#allocation2 + $0xf0] sm:$0xff] %v871
        %904 = vst [vmem:[#allocation2 + $0xf8] sm:$0xff] %v872
        %p905 = scmp.eq.s32.totalorder %s29, 1
        // Predicated region
        $region53: #{tpu_custom_call.1} parent=35 // pred_check
          %p906 = pneg %p905
        $region54: #{tpu_custom_call.1} parent=35 // pred_check_branch
          %908 = sbr.rel (%p906) target = $region56
        $region55: #{tpu_custom_call.1} parent=35 // pred_region
          %v909 = vld [vmem:[#allocation2] sm:$0xff]
          %v910 = vld [vmem:[#allocation2 + $0x8] sm:$0xff]
          %v911 = vld [vmem:[#allocation2 + $0x10] sm:$0xff]
          %v912 = vld [vmem:[#allocation2 + $0x18] sm:$0xff]
          %v913 = vld [vmem:[#allocation2 + $0x20] sm:$0xff]
          %v914 = vld [vmem:[#allocation2 + $0x28] sm:$0xff]
          %v915 = vld [vmem:[#allocation2 + $0x30] sm:$0xff]
          %v916 = vld [vmem:[#allocation2 + $0x38] sm:$0xff]
          %v917 = vld [vmem:[#allocation2 + $0x40] sm:$0xff]
          %v918 = vld [vmem:[#allocation2 + $0x48] sm:$0xff]
          %v919 = vld [vmem:[#allocation2 + $0x50] sm:$0xff]
          %v920 = vld [vmem:[#allocation2 + $0x58] sm:$0xff]
          %v921 = vld [vmem:[#allocation2 + $0x60] sm:$0xff]
          %v922 = vld [vmem:[#allocation2 + $0x68] sm:$0xff]
          %v923 = vld [vmem:[#allocation2 + $0x70] sm:$0xff]
          %v924 = vld [vmem:[#allocation2 + $0x78] sm:$0xff]
          %v925 = vld [vmem:[#allocation2 + $0x80] sm:$0xff]
          %v926 = vld [vmem:[#allocation2 + $0x88] sm:$0xff]
          %v927 = vld [vmem:[#allocation2 + $0x90] sm:$0xff]
          %v928 = vld [vmem:[#allocation2 + $0x98] sm:$0xff]
          %v929 = vld [vmem:[#allocation2 + $0xa0] sm:$0xff]
          %v930 = vld [vmem:[#allocation2 + $0xa8] sm:$0xff]
          %v931 = vld [vmem:[#allocation2 + $0xb0] sm:$0xff]
          %v932 = vld [vmem:[#allocation2 + $0xb8] sm:$0xff]
          %v933 = vld [vmem:[#allocation2 + $0xc0] sm:$0xff]
          %v934 = vld [vmem:[#allocation2 + $0xc8] sm:$0xff]
          %v935 = vld [vmem:[#allocation2 + $0xd0] sm:$0xff]
          %v936 = vld [vmem:[#allocation2 + $0xd8] sm:$0xff]
          %v937 = vld [vmem:[#allocation2 + $0xe0] sm:$0xff]
          %v938 = vld [vmem:[#allocation2 + $0xe8] sm:$0xff]
          %v939 = vld [vmem:[#allocation2 + $0xf0] sm:$0xff]
          %v940 = vld [vmem:[#allocation2 + $0xf8] sm:$0xff]
          %v941 = vpack.c.bf16 %v910, %v909
          %v942 = vpack.c.bf16 %v912, %v911
          %v943 = vpack.c.bf16 %v914, %v913
          %v944 = vpack.c.bf16 %v916, %v915
          %v945 = vpack.c.bf16 %v918, %v917
          %v946 = vpack.c.bf16 %v920, %v919
          %v947 = vpack.c.bf16 %v922, %v921
          %v948 = vpack.c.bf16 %v924, %v923
          %v949 = vpack.c.bf16 %v926, %v925
          %v950 = vpack.c.bf16 %v928, %v927
          %v951 = vpack.c.bf16 %v930, %v929
          %v952 = vpack.c.bf16 %v932, %v931
          %v953 = vpack.c.bf16 %v934, %v933
          %v954 = vpack.c.bf16 %v936, %v935
          %v955 = vpack.c.bf16 %v938, %v937
          %v956 = vpack.c.bf16 %v940, %v939
          %v957 = vld [vmem:[#allocation8] sm:$0xff]
          %v958 = vld [vmem:[#allocation8 + $0x8] sm:$0xff]
          %v959 = vld [vmem:[#allocation8 + $0x10] sm:$0xff]
          %v960 = vld [vmem:[#allocation8 + $0x18] sm:$0xff]
          %v961 = vld [vmem:[#allocation8 + $0x20] sm:$0xff]
          %v962 = vld [vmem:[#allocation8 + $0x28] sm:$0xff]
          %v963 = vld [vmem:[#allocation8 + $0x30] sm:$0xff]
          %v964 = vld [vmem:[#allocation8 + $0x38] sm:$0xff]
          %v965 = vld [vmem:[#allocation8 + $0x40] sm:$0xff]
          %v966 = vld [vmem:[#allocation8 + $0x48] sm:$0xff]
          %v967 = vld [vmem:[#allocation8 + $0x50] sm:$0xff]
          %v968 = vld [vmem:[#allocation8 + $0x58] sm:$0xff]
          %v969 = vld [vmem:[#allocation8 + $0x60] sm:$0xff]
          %v970 = vld [vmem:[#allocation8 + $0x68] sm:$0xff]
          %v971 = vld [vmem:[#allocation8 + $0x70] sm:$0xff]
          %v972 = vld [vmem:[#allocation8 + $0x78] sm:$0xff]
          %v973 = vld [vmem:[%s3] sm:$0x3]
          %v975 = vlaneseq
          %v976 = vshrl.u32 %v975, 7
          %v977 = vsub.s32 0, %v976
          %v978 = vrot.slane %v973, %v977
          %v979 = vlaneseq
          %v980 = vshrl.u32 %v979, 7
          %v981 = vsub.s32 1, %v980
          %v982 = vrot.slane %v973, %v981
          %v1001 = vunpack.c.l.b16 %v957
          %v1002 = vunpack.c.h.b16 %v957
          %v1003 = vunpack.c.l.b16 %v958
          %v1004 = vunpack.c.h.b16 %v958
          %v1005 = vunpack.c.l.b16 %v959
          %v1006 = vunpack.c.h.b16 %v959
          %v1007 = vunpack.c.l.b16 %v960
          %v1008 = vunpack.c.h.b16 %v960
          %v1009 = vunpack.c.l.b16 %v961
          %v1010 = vunpack.c.h.b16 %v961
          %v1011 = vunpack.c.l.b16 %v962
          %v1012 = vunpack.c.h.b16 %v962
          %v1013 = vunpack.c.l.b16 %v963
          %v1014 = vunpack.c.h.b16 %v963
          %v1015 = vunpack.c.l.b16 %v964
          %v1016 = vunpack.c.h.b16 %v964
          %v1017 = vunpack.c.l.b16 %v965
          %v1018 = vunpack.c.h.b16 %v965
          %v1019 = vunpack.c.l.b16 %v966
          %v1020 = vunpack.c.h.b16 %v966
          %v1021 = vunpack.c.l.b16 %v967
          %v1022 = vunpack.c.h.b16 %v967
          %v1023 = vunpack.c.l.b16 %v968
          %v1024 = vunpack.c.h.b16 %v968
          %v1025 = vunpack.c.l.b16 %v969
          %v1026 = vunpack.c.h.b16 %v969
          %v1027 = vunpack.c.l.b16 %v970
          %v1028 = vunpack.c.h.b16 %v970
          %v1029 = vunpack.c.l.b16 %v971
          %v1030 = vunpack.c.h.b16 %v971
          %v1031 = vunpack.c.l.b16 %v972
          %v1032 = vunpack.c.h.b16 %v972
          %v1033 = vpack.c.b16 %v1003, %v1001
          %v1034 = vpack.c.b16 %v1004, %v1002
          %v1035 = vpack.c.b16 %v1007, %v1005
          %v1036 = vpack.c.b16 %v1008, %v1006
          %v1037 = vpack.c.b16 %v1011, %v1009
          %v1038 = vpack.c.b16 %v1012, %v1010
          %v1039 = vpack.c.b16 %v1015, %v1013
          %v1040 = vpack.c.b16 %v1016, %v1014
          %v1041 = vpack.c.b16 %v1019, %v1017
          %v1042 = vpack.c.b16 %v1020, %v1018
          %v1043 = vpack.c.b16 %v1023, %v1021
          %v1044 = vpack.c.b16 %v1024, %v1022
          %v1045 = vpack.c.b16 %v1027, %v1025
          %v1046 = vpack.c.b16 %v1028, %v1026
          %v1047 = vpack.c.b16 %v1031, %v1029
          %v1048 = vpack.c.b16 %v1032, %v1030
          %1065 = vmatprep.subr.bf16.mxu0 %v1048
          %1066 = vmatpush1.bf16.msra.mxu0 %v1047
          %1067 = vmatprep.subr.bf16.mxu0 %v1046
          %1068 = vmatpush1.bf16.msra.mxu0 %v1045
          %1069 = vmatprep.subr.bf16.mxu0 %v1044
          %1070 = vmatpush1.bf16.msra.mxu0 %v1043
          %1071 = vmatprep.subr.bf16.mxu0 %v1042
          %1072 = vmatpush1.bf16.msra.mxu0 %v1041
          %1073 = vmatprep.subr.bf16.mxu0 %v1040
          %1074 = vmatpush1.bf16.msra.mxu0 %v1039
          %1075 = vmatprep.subr.bf16.mxu0 %v1038
          %1076 = vmatpush1.bf16.msra.mxu0 %v1037
          %1077 = vmatprep.subr.bf16.mxu0 %v1036
          %1078 = vmatpush1.bf16.msra.mxu0 %v1035
          %1079 = vmatprep.subr.bf16.mxu0 %v1034
          %1080 = vmatpush1.bf16.msra.mxu0 %v1033
          %1081 = vmatprep.subr.bf16.mxu0 0
          %1082 = vmatpush2.bf16.msra.mxu0 0
          %1083 = vmatprep.subr.bf16.mxu0 0
          %1084 = vmatpush2.bf16.msra.mxu0 0
          %1085 = vmatprep.subr.bf16.mxu0 0
          %1086 = vmatpush2.bf16.msra.mxu0 0
          %1087 = vmatprep.subr.bf16.mxu0 0
          %1088 = vmatpush2.bf16.msra.mxu0 0
          %1089 = vmatprep.subr.bf16.mxu0 0
          %1090 = vmatpush2.bf16.msra.mxu0 0
          %1091 = vmatprep.subr.bf16.mxu0 0
          %1092 = vmatpush2.bf16.msra.mxu0 0
          %1093 = vmatprep.subr.bf16.mxu0 0
          %1094 = vmatpush2.bf16.msra.mxu0 0
          %1095 = vmatprep.subr.bf16.mxu0 0
          %1096 = vmatpush2.bf16.msra.mxu0 0
          %1097 = vmatprep.mubr.bf16.mxu0 0
          %1098 = vmatmul.mubr.bf16.gmra.mxu0 %v941
          %v1099 = vpop.f32.mrf.mxu0
          %v1100 = vadd.f32 %v978, %v1099
          %v1101 = vpop.f32.mrf.mxu0
          %v1102 = vadd.f32 %v982, %v1101
          %v1103 = vpop.f32.mrf.mxu0
          %v1104 = vadd.f32 %v978, %v1103
          %v1105 = vpop.f32.mrf.mxu0
          %v1106 = vadd.f32 %v982, %v1105
          %1107 = vmatprep.mubr.bf16.mxu0 0
          %1108 = vmatmul.mubr.bf16.gmra.mxu0 %v942
          %v1109 = vpop.f32.mrf.mxu0
          %v1110 = vadd.f32 %v978, %v1109
          %v1111 = vpop.f32.mrf.mxu0
          %v1112 = vadd.f32 %v982, %v1111
          %v1113 = vpop.f32.mrf.mxu0
          %v1114 = vadd.f32 %v978, %v1113
          %v1115 = vpop.f32.mrf.mxu0
          %v1116 = vadd.f32 %v982, %v1115
          %1117 = vmatprep.mubr.bf16.mxu0 0
          %1118 = vmatmul.mubr.bf16.gmra.mxu0 %v943
          %v1119 = vpop.f32.mrf.mxu0
          %v1120 = vadd.f32 %v978, %v1119
          %v1121 = vpop.f32.mrf.mxu0
          %v1122 = vadd.f32 %v982, %v1121
          %v1123 = vpop.f32.mrf.mxu0
          %v1124 = vadd.f32 %v978, %v1123
          %v1125 = vpop.f32.mrf.mxu0
          %v1126 = vadd.f32 %v982, %v1125
          %1127 = vmatprep.mubr.bf16.mxu0 0
          %1128 = vmatmul.mubr.bf16.gmra.mxu0 %v944
          %v1129 = vpop.f32.mrf.mxu0
          %v1130 = vadd.f32 %v978, %v1129
          %v1131 = vpop.f32.mrf.mxu0
          %v1132 = vadd.f32 %v982, %v1131
          %v1133 = vpop.f32.mrf.mxu0
          %v1134 = vadd.f32 %v978, %v1133
          %v1135 = vpop.f32.mrf.mxu0
          %v1136 = vadd.f32 %v982, %v1135
          %1137 = vmatprep.mubr.bf16.mxu0 0
          %1138 = vmatmul.mubr.bf16.gmra.mxu0 %v945
          %v1139 = vpop.f32.mrf.mxu0
          %v1140 = vadd.f32 %v978, %v1139
          %v1141 = vpop.f32.mrf.mxu0
          %v1142 = vadd.f32 %v982, %v1141
          %v1143 = vpop.f32.mrf.mxu0
          %v1144 = vadd.f32 %v978, %v1143
          %v1145 = vpop.f32.mrf.mxu0
          %v1146 = vadd.f32 %v982, %v1145
          %1147 = vmatprep.mubr.bf16.mxu0 0
          %1148 = vmatmul.mubr.bf16.gmra.mxu0 %v946
          %v1149 = vpop.f32.mrf.mxu0
          %v1150 = vadd.f32 %v978, %v1149
          %v1151 = vpop.f32.mrf.mxu0
          %v1152 = vadd.f32 %v982, %v1151
          %v1153 = vpop.f32.mrf.mxu0
          %v1154 = vadd.f32 %v978, %v1153
          %v1155 = vpop.f32.mrf.mxu0
          %v1156 = vadd.f32 %v982, %v1155
          %1157 = vmatprep.mubr.bf16.mxu0 0
          %1158 = vmatmul.mubr.bf16.gmra.mxu0 %v947
          %v1159 = vpop.f32.mrf.mxu0
          %v1160 = vadd.f32 %v978, %v1159
          %v1161 = vpop.f32.mrf.mxu0
          %v1162 = vadd.f32 %v982, %v1161
          %v1163 = vpop.f32.mrf.mxu0
          %v1164 = vadd.f32 %v978, %v1163
          %v1165 = vpop.f32.mrf.mxu0
          %v1166 = vadd.f32 %v982, %v1165
          %1167 = vmatprep.mubr.bf16.mxu0 0
          %1168 = vmatmul.mubr.bf16.gmra.mxu0 %v948
          %v1169 = vpop.f32.mrf.mxu0
          %v1170 = vadd.f32 %v978, %v1169
          %v1171 = vpop.f32.mrf.mxu0
          %v1172 = vadd.f32 %v982, %v1171
          %v1173 = vpop.f32.mrf.mxu0
          %v1174 = vadd.f32 %v978, %v1173
          %v1175 = vpop.f32.mrf.mxu0
          %v1176 = vadd.f32 %v982, %v1175
          %1177 = vmatprep.mubr.bf16.mxu0 0
          %1178 = vmatmul.mubr.bf16.gmra.mxu0 %v949
          %v1179 = vpop.f32.mrf.mxu0
          %v1180 = vadd.f32 %v978, %v1179
          %v1181 = vpop.f32.mrf.mxu0
          %v1182 = vadd.f32 %v982, %v1181
          %v1183 = vpop.f32.mrf.mxu0
          %v1184 = vadd.f32 %v978, %v1183
          %v1185 = vpop.f32.mrf.mxu0
          %v1186 = vadd.f32 %v982, %v1185
          %1187 = vmatprep.mubr.bf16.mxu0 0
          %1188 = vmatmul.mubr.bf16.gmra.mxu0 %v950
          %v1189 = vpop.f32.mrf.mxu0
          %v1190 = vadd.f32 %v978, %v1189
          %v1191 = vpop.f32.mrf.mxu0
          %v1192 = vadd.f32 %v982, %v1191
          %v1193 = vpop.f32.mrf.mxu0
          %v1194 = vadd.f32 %v978, %v1193
          %v1195 = vpop.f32.mrf.mxu0
          %v1196 = vadd.f32 %v982, %v1195
          %1197 = vmatprep.mubr.bf16.mxu0 0
          %1198 = vmatmul.mubr.bf16.gmra.mxu0 %v951
          %v1199 = vpop.f32.mrf.mxu0
          %v1200 = vadd.f32 %v978, %v1199
          %v1201 = vpop.f32.mrf.mxu0
          %v1202 = vadd.f32 %v982, %v1201
          %v1203 = vpop.f32.mrf.mxu0
          %v1204 = vadd.f32 %v978, %v1203
          %v1205 = vpop.f32.mrf.mxu0
          %v1206 = vadd.f32 %v982, %v1205
          %1207 = vmatprep.mubr.bf16.mxu0 0
          %1208 = vmatmul.mubr.bf16.gmra.mxu0 %v952
          %v1209 = vpop.f32.mrf.mxu0
          %v1210 = vadd.f32 %v978, %v1209
          %v1211 = vpop.f32.mrf.mxu0
          %v1212 = vadd.f32 %v982, %v1211
          %v1213 = vpop.f32.mrf.mxu0
          %v1214 = vadd.f32 %v978, %v1213
          %v1215 = vpop.f32.mrf.mxu0
          %v1216 = vadd.f32 %v982, %v1215
          %1217 = vmatprep.mubr.bf16.mxu0 0
          %1218 = vmatmul.mubr.bf16.gmra.mxu0 %v953
          %v1219 = vpop.f32.mrf.mxu0
          %v1220 = vadd.f32 %v978, %v1219
          %v1221 = vpop.f32.mrf.mxu0
          %v1222 = vadd.f32 %v982, %v1221
          %v1223 = vpop.f32.mrf.mxu0
          %v1224 = vadd.f32 %v978, %v1223
          %v1225 = vpop.f32.mrf.mxu0
          %v1226 = vadd.f32 %v982, %v1225
          %1227 = vmatprep.mubr.bf16.mxu0 0
          %1228 = vmatmul.mubr.bf16.gmra.mxu0 %v954
          %v1229 = vpop.f32.mrf.mxu0
          %v1230 = vadd.f32 %v978, %v1229
          %v1231 = vpop.f32.mrf.mxu0
          %v1232 = vadd.f32 %v982, %v1231
          %v1233 = vpop.f32.mrf.mxu0
          %v1234 = vadd.f32 %v978, %v1233
          %v1235 = vpop.f32.mrf.mxu0
          %v1236 = vadd.f32 %v982, %v1235
          %1237 = vmatprep.mubr.bf16.mxu0 0
          %1238 = vmatmul.mubr.bf16.gmra.mxu0 %v955
          %v1239 = vpop.f32.mrf.mxu0
          %v1240 = vadd.f32 %v978, %v1239
          %v1241 = vpop.f32.mrf.mxu0
          %v1242 = vadd.f32 %v982, %v1241
          %v1243 = vpop.f32.mrf.mxu0
          %v1244 = vadd.f32 %v978, %v1243
          %v1245 = vpop.f32.mrf.mxu0
          %v1246 = vadd.f32 %v982, %v1245
          %1247 = vmatprep.mubr.bf16.mxu0 0
          %1248 = vmatmul.mubr.bf16.gmra.mxu0 %v956
          %v1249 = vpop.f32.mrf.mxu0
          %v1250 = vadd.f32 %v978, %v1249
          %v1251 = vpop.f32.mrf.mxu0
          %v1252 = vadd.f32 %v982, %v1251
          %v1253 = vpop.f32.mrf.mxu0
          %v1254 = vadd.f32 %v978, %v1253
          %v1255 = vpop.f32.mrf.mxu0
          %v1256 = vadd.f32 %v982, %v1255
          %1257 = vdwg.mxu0
          %v1258 = vmax.f32 %v1100, 0.0
          %v1259 = vmax.f32 %v1102, 0.0
          %v1260 = vmax.f32 %v1104, 0.0
          %v1261 = vmax.f32 %v1106, 0.0
          %v1262 = vmax.f32 %v1110, 0.0
          %v1263 = vmax.f32 %v1112, 0.0
          %v1264 = vmax.f32 %v1114, 0.0
          %v1265 = vmax.f32 %v1116, 0.0
          %v1266 = vmax.f32 %v1120, 0.0
          %v1267 = vmax.f32 %v1122, 0.0
          %v1268 = vmax.f32 %v1124, 0.0
          %v1269 = vmax.f32 %v1126, 0.0
          %v1270 = vmax.f32 %v1130, 0.0
          %v1271 = vmax.f32 %v1132, 0.0
          %v1272 = vmax.f32 %v1134, 0.0
          %v1273 = vmax.f32 %v1136, 0.0
          %v1274 = vmax.f32 %v1140, 0.0
          %v1275 = vmax.f32 %v1142, 0.0
          %v1276 = vmax.f32 %v1144, 0.0
          %v1277 = vmax.f32 %v1146, 0.0
          %v1278 = vmax.f32 %v1150, 0.0
          %v1279 = vmax.f32 %v1152, 0.0
          %v1280 = vmax.f32 %v1154, 0.0
          %v1281 = vmax.f32 %v1156, 0.0
          %v1282 = vmax.f32 %v1160, 0.0
          %v1283 = vmax.f32 %v1162, 0.0
          %v1284 = vmax.f32 %v1164, 0.0
          %v1285 = vmax.f32 %v1166, 0.0
          %v1286 = vmax.f32 %v1170, 0.0
          %v1287 = vmax.f32 %v1172, 0.0
          %v1288 = vmax.f32 %v1174, 0.0
          %v1289 = vmax.f32 %v1176, 0.0
          %v1290 = vmax.f32 %v1180, 0.0
          %v1291 = vmax.f32 %v1182, 0.0
          %v1292 = vmax.f32 %v1184, 0.0
          %v1293 = vmax.f32 %v1186, 0.0
          %v1294 = vmax.f32 %v1190, 0.0
          %v1295 = vmax.f32 %v1192, 0.0
          %v1296 = vmax.f32 %v1194, 0.0
          %v1297 = vmax.f32 %v1196, 0.0
          %v1298 = vmax.f32 %v1200, 0.0
          %v1299 = vmax.f32 %v1202, 0.0
          %v1300 = vmax.f32 %v1204, 0.0
          %v1301 = vmax.f32 %v1206, 0.0
          %v1302 = vmax.f32 %v1210, 0.0
          %v1303 = vmax.f32 %v1212, 0.0
          %v1304 = vmax.f32 %v1214, 0.0
          %v1305 = vmax.f32 %v1216, 0.0
          %v1306 = vmax.f32 %v1220, 0.0
          %v1307 = vmax.f32 %v1222, 0.0
          %v1308 = vmax.f32 %v1224, 0.0
          %v1309 = vmax.f32 %v1226, 0.0
          %v1310 = vmax.f32 %v1230, 0.0
          %v1311 = vmax.f32 %v1232, 0.0
          %v1312 = vmax.f32 %v1234, 0.0
          %v1313 = vmax.f32 %v1236, 0.0
          %v1314 = vmax.f32 %v1240, 0.0
          %v1315 = vmax.f32 %v1242, 0.0
          %v1316 = vmax.f32 %v1244, 0.0
          %v1317 = vmax.f32 %v1246, 0.0
          %v1318 = vmax.f32 %v1250, 0.0
          %v1319 = vmax.f32 %v1252, 0.0
          %v1320 = vmax.f32 %v1254, 0.0
          %v1321 = vmax.f32 %v1256, 0.0
          %v1322 = vpack.c.bf16 %v1260, %v1258
          %v1323 = vpack.c.bf16 %v1261, %v1259
          %v1324 = vpack.c.bf16 %v1264, %v1262
          %v1325 = vpack.c.bf16 %v1265, %v1263
          %v1326 = vpack.c.bf16 %v1268, %v1266
          %v1327 = vpack.c.bf16 %v1269, %v1267
          %v1328 = vpack.c.bf16 %v1272, %v1270
          %v1329 = vpack.c.bf16 %v1273, %v1271
          %v1330 = vpack.c.bf16 %v1276, %v1274
          %v1331 = vpack.c.bf16 %v1277, %v1275
          %v1332 = vpack.c.bf16 %v1280, %v1278
          %v1333 = vpack.c.bf16 %v1281, %v1279
          %v1334 = vpack.c.bf16 %v1284, %v1282
          %v1335 = vpack.c.bf16 %v1285, %v1283
          %v1336 = vpack.c.bf16 %v1288, %v1286
          %v1337 = vpack.c.bf16 %v1289, %v1287
          %v1338 = vpack.c.bf16 %v1292, %v1290
          %v1339 = vpack.c.bf16 %v1293, %v1291
          %v1340 = vpack.c.bf16 %v1296, %v1294
          %v1341 = vpack.c.bf16 %v1297, %v1295
          %v1342 = vpack.c.bf16 %v1300, %v1298
          %v1343 = vpack.c.bf16 %v1301, %v1299
          %v1344 = vpack.c.bf16 %v1304, %v1302
          %v1345 = vpack.c.bf16 %v1305, %v1303
          %v1346 = vpack.c.bf16 %v1308, %v1306
          %v1347 = vpack.c.bf16 %v1309, %v1307
          %v1348 = vpack.c.bf16 %v1312, %v1310
          %v1349 = vpack.c.bf16 %v1313, %v1311
          %v1350 = vpack.c.bf16 %v1316, %v1314
          %v1351 = vpack.c.bf16 %v1317, %v1315
          %v1352 = vpack.c.bf16 %v1320, %v1318
          %v1353 = vpack.c.bf16 %v1321, %v1319
          %v1386 = vunpack.c.l.b16 %v1322
          %v1387 = vunpack.c.l.b16 %v1323
          %v1388 = vunpack.c.h.b16 %v1322
          %v1389 = vunpack.c.h.b16 %v1323
          %v1390 = vunpack.c.l.b16 %v1324
          %v1391 = vunpack.c.l.b16 %v1325
          %v1392 = vunpack.c.h.b16 %v1324
          %v1393 = vunpack.c.h.b16 %v1325
          %v1394 = vunpack.c.l.b16 %v1326
          %v1395 = vunpack.c.l.b16 %v1327
          %v1396 = vunpack.c.h.b16 %v1326
          %v1397 = vunpack.c.h.b16 %v1327
          %v1398 = vunpack.c.l.b16 %v1328
          %v1399 = vunpack.c.l.b16 %v1329
          %v1400 = vunpack.c.h.b16 %v1328
          %v1401 = vunpack.c.h.b16 %v1329
          %v1402 = vunpack.c.l.b16 %v1330
          %v1403 = vunpack.c.l.b16 %v1331
          %v1404 = vunpack.c.h.b16 %v1330
          %v1405 = vunpack.c.h.b16 %v1331
          %v1406 = vunpack.c.l.b16 %v1332
          %v1407 = vunpack.c.l.b16 %v1333
          %v1408 = vunpack.c.h.b16 %v1332
          %v1409 = vunpack.c.h.b16 %v1333
          %v1410 = vunpack.c.l.b16 %v1334
          %v1411 = vunpack.c.l.b16 %v1335
          %v1412 = vunpack.c.h.b16 %v1334
          %v1413 = vunpack.c.h.b16 %v1335
          %v1414 = vunpack.c.l.b16 %v1336
          %v1415 = vunpack.c.l.b16 %v1337
          %v1416 = vunpack.c.h.b16 %v1336
          %v1417 = vunpack.c.h.b16 %v1337
          %v1418 = vunpack.c.l.b16 %v1338
          %v1419 = vunpack.c.l.b16 %v1339
          %v1420 = vunpack.c.h.b16 %v1338
          %v1421 = vunpack.c.h.b16 %v1339
          %v1422 = vunpack.c.l.b16 %v1340
          %v1423 = vunpack.c.l.b16 %v1341
          %v1424 = vunpack.c.h.b16 %v1340
          %v1425 = vunpack.c.h.b16 %v1341
          %v1426 = vunpack.c.l.b16 %v1342
          %v1427 = vunpack.c.l.b16 %v1343
          %v1428 = vunpack.c.h.b16 %v1342
          %v1429 = vunpack.c.h.b16 %v1343
          %v1430 = vunpack.c.l.b16 %v1344
          %v1431 = vunpack.c.l.b16 %v1345
          %v1432 = vunpack.c.h.b16 %v1344
          %v1433 = vunpack.c.h.b16 %v1345
          %v1434 = vunpack.c.l.b16 %v1346
          %v1435 = vunpack.c.l.b16 %v1347
          %v1436 = vunpack.c.h.b16 %v1346
          %v1437 = vunpack.c.h.b16 %v1347
          %v1438 = vunpack.c.l.b16 %v1348
          %v1439 = vunpack.c.l.b16 %v1349
          %v1440 = vunpack.c.h.b16 %v1348
          %v1441 = vunpack.c.h.b16 %v1349
          %v1442 = vunpack.c.l.b16 %v1350
          %v1443 = vunpack.c.l.b16 %v1351
          %v1444 = vunpack.c.h.b16 %v1350
          %v1445 = vunpack.c.h.b16 %v1351
          %v1446 = vunpack.c.l.b16 %v1352
          %v1447 = vunpack.c.l.b16 %v1353
          %v1448 = vunpack.c.h.b16 %v1352
          %v1449 = vunpack.c.h.b16 %v1353
          %v1450 = vpack.c.b16 %v1387, %v1386
          %v1451 = vpack.c.b16 %v1389, %v1388
          %v1452 = vpack.c.b16 %v1391, %v1390
          %v1453 = vpack.c.b16 %v1393, %v1392
          %v1454 = vpack.c.b16 %v1395, %v1394
          %v1455 = vpack.c.b16 %v1397, %v1396
          %v1456 = vpack.c.b16 %v1399, %v1398
          %v1457 = vpack.c.b16 %v1401, %v1400
          %v1458 = vpack.c.b16 %v1403, %v1402
          %v1459 = vpack.c.b16 %v1405, %v1404
          %v1460 = vpack.c.b16 %v1407, %v1406
          %v1461 = vpack.c.b16 %v1409, %v1408
          %v1462 = vpack.c.b16 %v1411, %v1410
          %v1463 = vpack.c.b16 %v1413, %v1412
          %v1464 = vpack.c.b16 %v1415, %v1414
          %v1465 = vpack.c.b16 %v1417, %v1416
          %v1466 = vpack.c.b16 %v1419, %v1418
          %v1467 = vpack.c.b16 %v1421, %v1420
          %v1468 = vpack.c.b16 %v1423, %v1422
          %v1469 = vpack.c.b16 %v1425, %v1424
          %v1470 = vpack.c.b16 %v1427, %v1426
          %v1471 = vpack.c.b16 %v1429, %v1428
          %v1472 = vpack.c.b16 %v1431, %v1430
          %v1473 = vpack.c.b16 %v1433, %v1432
          %v1474 = vpack.c.b16 %v1435, %v1434
          %v1475 = vpack.c.b16 %v1437, %v1436
          %v1476 = vpack.c.b16 %v1439, %v1438
          %v1477 = vpack.c.b16 %v1441, %v1440
          %v1478 = vpack.c.b16 %v1443, %v1442
          %v1479 = vpack.c.b16 %v1445, %v1444
          %v1480 = vpack.c.b16 %v1447, %v1446
          %v1481 = vpack.c.b16 %v1449, %v1448
          %1514 = vst [vmem:[%s286] sm:$0xff] %v1450
          %1515 = vst [vmem:[%s286 + $0x8] sm:$0xff] %v1451
          %1516 = vst [vmem:[%s286 + $0x10] sm:$0xff] %v1452
          %1517 = vst [vmem:[%s286 + $0x18] sm:$0xff] %v1453
          %1518 = vst [vmem:[%s286 + $0x20] sm:$0xff] %v1454
          %1519 = vst [vmem:[%s286 + $0x28] sm:$0xff] %v1455
          %1520 = vst [vmem:[%s286 + $0x30] sm:$0xff] %v1456
          %1521 = vst [vmem:[%s286 + $0x38] sm:$0xff] %v1457
          %1522 = vst [vmem:[%s286 + $0x40] sm:$0xff] %v1458
          %1523 = vst [vmem:[%s286 + $0x48] sm:$0xff] %v1459
          %1524 = vst [vmem:[%s286 + $0x50] sm:$0xff] %v1460
          %1525 = vst [vmem:[%s286 + $0x58] sm:$0xff] %v1461
          %1526 = vst [vmem:[%s286 + $0x60] sm:$0xff] %v1462
          %1527 = vst [vmem:[%s286 + $0x68] sm:$0xff] %v1463
          %1528 = vst [vmem:[%s286 + $0x70] sm:$0xff] %v1464
          %1529 = vst [vmem:[%s286 + $0x78] sm:$0xff] %v1465
          %1530 = vst [vmem:[%s286 + $0x80] sm:$0xff] %v1466
          %1531 = vst [vmem:[%s286 + $0x88] sm:$0xff] %v1467
          %1532 = vst [vmem:[%s286 + $0x90] sm:$0xff] %v1468
          %1533 = vst [vmem:[%s286 + $0x98] sm:$0xff] %v1469
          %1534 = vst [vmem:[%s286 + $0xa0] sm:$0xff] %v1470
          %1535 = vst [vmem:[%s286 + $0xa8] sm:$0xff] %v1471
          %1536 = vst [vmem:[%s286 + $0xb0] sm:$0xff] %v1472
          %1537 = vst [vmem:[%s286 + $0xb8] sm:$0xff] %v1473
          %1538 = vst [vmem:[%s286 + $0xc0] sm:$0xff] %v1474
          %1539 = vst [vmem:[%s286 + $0xc8] sm:$0xff] %v1475
          %1540 = vst [vmem:[%s286 + $0xd0] sm:$0xff] %v1476
          %1541 = vst [vmem:[%s286 + $0xd8] sm:$0xff] %v1477
          %1542 = vst [vmem:[%s286 + $0xe0] sm:$0xff] %v1478
          %1543 = vst [vmem:[%s286 + $0xe8] sm:$0xff] %v1479
          %1544 = vst [vmem:[%s286 + $0xf0] sm:$0xff] %v1480
          %1545 = vst [vmem:[%s286 + $0xf8] sm:$0xff] %v1481
        $region56: #{tpu_custom_call.1} parent=35 // pred_fallthru
          _
        %s1546 = sand.u32 %s140, 1
        %s1547 = scalar_lea.sflag [#allocation5], %s1546
        %s1548 = sand.u32 %s140, 1
        %s1549 = smul.addr %s1548, 256
        %s1550 = scalar_lea.vmem [#allocation9], %s1549
        // Predicated region
        $region57: #{tpu_custom_call.1} parent=35 // pred_check
          %p1551 = pneg %p150
        $region58: #{tpu_custom_call.1} parent=35 // pred_check_branch
          %1553 = sbr.rel (%p1551) target = $region60
        $region59: #{tpu_custom_call.1} parent=35 // pred_region
          %s1554 = smul.u32 32, %s28
          %s1556 = ssub.s32 4096, 4096
          %1557 = vsyncadd %s1547, %s1556
          %s1558 = smul.addr %s1554, 2
          %s1559 = smul.addr %s1558, 64
          %s1560 = scalar_lea.hbm %s4, %s1559
          %s1561 = sshll.u32 %s1550, 4
          %s1562 = int_to_ptr.vmem [resolvable:$true] %s1561
          %1567 = dma.vmem_to_hbm [thread:$0]  %s1562, 4096, %s1560, %s1547, 128, 128, 8
        $region60: #{tpu_custom_call.1} parent=35 // pred_fallthru
          _
      $region36: #{tpu_custom_call.1} parent=5 // pred_fallthru
        _
      %p1568 = scmp.le.s32.totalorder 2, %s19
      // Predicated region
      $region61: #{tpu_custom_call.1} parent=5 // pred_check
        %p1569 = pneg %p1568
      $region62: #{tpu_custom_call.1} parent=5 // pred_check_branch
        %1571 = sbr.rel (%p1569) target = $region64
      $region63: #{tpu_custom_call.1} parent=5 // pred_region
        %s1572 = ssub.s32 %s19, 2
        // Predicated region
        $region65: #{tpu_custom_call.1} parent=63 // pred_check
          %p1573 = pneg %p156
        $region66: #{tpu_custom_call.1} parent=63 // pred_check_branch
          %1575 = sbr.rel (%p1573) target = $region68
        $region67: #{tpu_custom_call.1} parent=63 // pred_region
          %s1576 = sand.u32 %s141, 1
          %s1577 = scalar_lea.sflag [#allocation5], %s1576
          %s1578 = sand.u32 %s141, 1
          %s1579 = smul.addr %s1578, 256
          %s1580 = scalar_lea.vmem [#allocation9], %s1579
          %1581 = dma.done %s1577, 4096
        $region68: #{tpu_custom_call.1} parent=63 // pred_fallthru
          _
      $region64: #{tpu_custom_call.1} parent=5 // pred_fallthru
        _
    $region6: #{tpu_custom_call.1} parent=1 // loop_footer
      %s23 = sadd.s32 1, %s19
    $region7: #{tpu_custom_call.1} parent=1 // loop_footer_branch
      %18 = sbr.rel target = $region3
    $region8: #{tpu_custom_call.1} parent=1 // loop_exit
      _
    %1582 = vsyncpa [#allocation4], 1
    %s1583 = scalar_lea.sflag [#allocation4], 1
    %1584 = vsyncpa %s1583, 1
    %1585 = vsyncpa [#allocation7], 1
    %s1586 = scalar_lea.sflag [#allocation7], 1
    %1587 = vsyncpa %s1586, 1
    %1588 = vsyncpa [#allocation5], 1
    %s1589 = scalar_lea.sflag [#allocation5], 1
    %1590 = vsyncpa %s1589, 1

</llo_original>
